<compile_context>
chip_gen: v7x
topology: tpu7x:2x2x1
jax: 0.10.0
libtpu: 0.0.40
codegen_flags: <defaults>
</compile_context>

<pallas_src>
import jax
import jax.numpy as jnp
from jax import lax
from jax.experimental import pallas as pl
from jax.experimental.pallas import tpu as pltpu


def _resblock_kernel(x_ref, top_ref, bot_ref, w_ref, b_ref, o_ref, acc_ref):
    """One (n, t) grid step: 3x3 conv + bias + ReLU + residual on a row tile.

    x_ref  : (1, TH, W, C)  input row tile (auto-pipelined)
    top_ref: (1, 1,  W, C)  image row t*TH - 1  (clamped; ignored when t == 0)
    bot_ref: (1, 1,  W, C)  image row t*TH + TH (clamped; ignored when t == nh-1)
    w_ref  : (3, 3, C, C)   conv weights (HWIO), compute dtype
    b_ref  : (1, C)         bias, f32
    o_ref  : (1, TH, W, C)  output row tile
    acc_ref: (TH, W, C)     f32 VMEM accumulator scratch
    """
    t = pl.program_id(1)
    nh = pl.num_programs(1)
    _, TH, W, C = x_ref.shape
    cdt = w_ref.dtype

    # One aligned LHS slab, reused by all 9 taps (no shifted-window copies).
    slab = x_ref[0].astype(cdt).reshape(TH * W, C)

    # Re-zero every step: scratch persists across grid iterations and the grid
    # may be sharded across TensorCores (both axes are "parallel").
    acc_ref[...] = jnp.zeros_like(acc_ref)

    # 3x3 conv: out[h, w] += x[h + dh, w + dw] @ W[kh, kw]  (dh = kh-1, dw = kw-1)
    # The spatial shift is applied on the accumulate side with static slices;
    # out-of-tile horizontal taps are simply dropped (zero padding), vertical
    # out-of-tile taps are handled by the halo rows below.
    # TODO(synk): for C in [64, 256] fuse the 3 kw taps per kh into one
    # (C, 3C) matmul (pre-concat weights) to fill the MXU N dimension.
    for kh in range(3):
        dh = kh - 1
        for kw in range(3):
            dw = kw - 1
            y = jnp.dot(slab, w_ref[kh, kw],
                        preferred_element_type=jnp.float32).reshape(TH, W, C)
            h0, hl = max(0, -dh), TH - abs(dh)
            w0, wl = max(0, -dw), W - abs(dw)
            if hl > 0 and wl > 0:
                acc_ref[h0:h0 + hl, w0:w0 + wl, :] += (
                    y[h0 + dh:h0 + dh + hl, w0 + dw:w0 + dw + wl, :])

    # Top halo row: contributes only to output row 0 (taps kh == 0).
    @pl.when(t > 0)
    def _():
        hrow = top_ref[0, 0].astype(cdt)                        # (W, C)
        for kw in range(3):
            dw = kw - 1
            yh = jnp.dot(hrow, w_ref[0, kw],
                         preferred_element_type=jnp.float32)    # (W, C)
            w0, wl = max(0, -dw), W - abs(dw)
            acc_ref[0:1, w0:w0 + wl, :] += (
                yh[w0 + dw:w0 + dw + wl, :].reshape(1, wl, C))

    # Bottom halo row: contributes only to output row TH-1 (taps kh == 2).
    @pl.when(t < nh - 1)
    def _():
        hrow = bot_ref[0, 0].astype(cdt)
        for kw in range(3):
            dw = kw - 1
            yh = jnp.dot(hrow, w_ref[2, kw],
                         preferred_element_type=jnp.float32)
            w0, wl = max(0, -dw), W - abs(dw)
            acc_ref[TH - 1:TH, w0:w0 + wl, :] += (
                yh[w0 + dw:w0 + dw + wl, :].reshape(1, wl, C))

    # bias + ReLU in f32; residual is re-read right before the add so no f32
    # tile stays live across the MXU loop.
    conv = jnp.maximum(acc_ref[...] + b_ref[...].reshape(1, 1, C), 0.0)
    o_ref[0] = (x_ref[0].astype(jnp.float32) + conv).astype(o_ref.dtype)


def _vmem_limit_bytes():
    """~80% of per-core VMEM (headroom for compiler scratch / semaphores)."""
    try:
        cap = int(pltpu.get_tpu_info().vmem_capacity_bytes)
        cap = max(32 * 1024 * 1024, min(cap, 128 * 1024 * 1024))
    except Exception:
        cap = 64 * 1024 * 1024        # conservative (v7x-sized) fallback
    return int(cap * 0.8)


def _pick_tile_h(H, W, C, x_itemsize, out_itemsize, cdt_itemsize, budget_bytes):
    """Largest divisor of H whose per-step working set fits `budget_bytes`.

    Working set per grid step:
      2x input row tile + 2x output row tile (double-buffered)
      f32 accumulator scratch + compute-dtype slab (live value)
      weights (2 bufs) + bias + 4 halo rows  (fixed)
    Taking the largest fitting divisor also maximizes matmul rows per step
    (>= ~512 whenever the budget allows), amortizing per-step overhead.
    """
    fixed = 2 * 9 * C * C * cdt_itemsize + 2 * C * 4 + 4 * W * C * x_itemsize
    per_row = W * C * (2 * x_itemsize + 2 * out_itemsize + 4 + cdt_itemsize)
    best = 1
    for th in range(1, H + 1):
        if H % th == 0 and fixed + th * per_row <= budget_bytes:
            best = th
    return best


def resblock_forward(x_nchw, w_oihw, bias, *, tile_h=None,
                     compute_dtype=jnp.float32):
    """x_nchw: (N, C, H, W). Returns (N, C, H, W) = x + ReLU(conv3x3(x) + b).

    compute_dtype: dtype of the MXU operands (float32 or bfloat16).  Bias,
    ReLU, residual add and accumulation are always float32.
    """
    N, C, H, W = x_nchw.shape
    assert w_oihw.shape == (C, C, 3, 3)

    # Layout glue only (NCHW <-> NHWC, channels on lanes).  For a full network
    # keep activations NHWC across layers to drop these transposes entirely.
    x_nhwc = jnp.transpose(x_nchw, (0, 2, 3, 1))                        # (N,H,W,C)
    w_hwio = jnp.transpose(w_oihw, (2, 3, 1, 0)).astype(compute_dtype)  # (3,3,Ci,Co)
    b2d = bias.reshape(1, C).astype(jnp.float32)

    vmem_limit = _vmem_limit_bytes()
    if tile_h is None:
        tile_h = _pick_tile_h(
            H, W, C,
            jnp.dtype(x_nchw.dtype).itemsize, jnp.dtype(x_nchw.dtype).itemsize,
            jnp.dtype(compute_dtype).itemsize,
            budget_bytes=int(vmem_limit * 0.6))
    assert H % tile_h == 0, "tile_h must divide H"
    nh = H // tile_h

    # TODO(synk): add a W-tiling grid axis (left/right halo columns) for very
    # wide images on v7x, and an im2col (K = 9*C) formulation for C < 64.

    out_nhwc = pl.pallas_call(
        _resblock_kernel,
        out_shape=jax.ShapeDtypeStruct((N, H, W, C), x_nchw.dtype),
        grid_spec=pltpu.PrefetchScalarGridSpec(
            num_scalar_prefetch=0,
            grid=(N, nh),
            in_specs=[
                # Main row tile: auto-pipelined, double-buffered.
                pl.BlockSpec((1, tile_h, W, C), lambda n, t: (n, t, 0, 0)),
                # Top / bottom halo rows (single rows).  Index is clamped at
                # the image border; the kernel skips them there via pl.when.
                pl.BlockSpec(
                    (1, 1, W, C),
                    lambda n, t: (n, jnp.maximum(t * tile_h - 1, 0), 0, 0)),
                pl.BlockSpec(
                    (1, 1, W, C),
                    lambda n, t: (n, jnp.minimum(t * tile_h + tile_h, H - 1), 0, 0)),
                # Weights / bias: constant block index -> fetched once, revisited.
                pl.BlockSpec((3, 3, C, C), lambda n, t: (0, 0, 0, 0)),
                pl.BlockSpec((1, C), lambda n, t: (0, 0)),
            ],
            out_specs=pl.BlockSpec((1, tile_h, W, C), lambda n, t: (n, t, 0, 0)),
            scratch_shapes=[pltpu.VMEM((tile_h, W, C), jnp.float32)],
        ),
        compiler_params=pltpu.CompilerParams(
            dimension_semantics=("parallel", "parallel"),
            vmem_limit_bytes=vmem_limit,
        ),
    )(x_nhwc, x_nhwc, x_nhwc, w_hwio, b2d)

    return jnp.transpose(out_nhwc, (0, 3, 1, 2))                # back to NCHW


def _reference(x_nchw, w_oihw, bias):
    conv = lax.conv_general_dilated(
        x_nchw, w_oihw,
        window_strides=(1, 1), padding=((1, 1), (1, 1)),
        dimension_numbers=("NCHW", "OIHW", "NCHW"),
        precision=lax.Precision.HIGHEST,
    ) + bias.reshape(1, -1, 1, 1)
    return x_nchw + jnp.maximum(conv, 0.0)


if __name__ == "__main__":
    key = jax.random.PRNGKey(0)
    k_x, k_w, k_b = jax.random.split(key, 3)

    N, C, H, W = 2, 4, 16, 16
    # bf16-representable test data so the comparison is insensitive to the MXU
    # operand precision (f32 vs bf16 passes) on any TPU generation.
    x = jax.random.normal(k_x, (N, C, H, W), jnp.float32)
    x = x.astype(jnp.bfloat16).astype(jnp.float32)
    w = (jax.random.normal(k_w, (C, C, 3, 3), jnp.float32) * 0.1)
    w = w.astype(jnp.bfloat16).astype(jnp.float32)
    b = (jax.random.normal(k_b, (C,), jnp.float32) * 0.1)
    b = b.astype(jnp.bfloat16).astype(jnp.float32)

    ref = _reference(x, w, b)

    # Spatially tiled f32 path (exercises top / interior / bottom halo logic).
    out = jax.block_until_ready(resblock_forward(x, w, b, tile_h=4))
    assert out.shape == (N, C, H, W)
    assert jnp.allclose(out, ref, atol=1e-3, rtol=1e-3), \
        float(jnp.max(jnp.abs(out - ref)))

    # Auto tile_h (whole image in one row tile here; nh == 1 edge case).
    out_full = jax.block_until_ready(resblock_forward(x, w, b))
    assert jnp.allclose(out_full, ref, atol=1e-3, rtol=1e-3), \
        float(jnp.max(jnp.abs(out_full - ref)))

    # bf16 MXU operands (fast path on v5e/v6e/v7x); f32 accumulate/bias/ReLU/residual.
    out_bf16 = jax.block_until_ready(
        resblock_forward(x, w, b, tile_h=8, compute_dtype=jnp.bfloat16))
    assert jnp.allclose(out_bf16, ref, atol=2e-2, rtol=2e-2), \
        float(jnp.max(jnp.abs(out_bf16 - ref)))

    print("KERNEL_OK")
</pallas_src>

<mosaic_0001>
module attributes {stable_mosaic.version = 11 : i64} {
  func.func @_resblock_kernel(%arg0: i32, %arg1: i32, %arg2: memref<1x4x16x4xf32, #tpu.memory_space<vmem>>, %arg3: memref<1x1x16x4xf32, #tpu.memory_space<vmem>>, %arg4: memref<1x1x16x4xf32, #tpu.memory_space<vmem>>, %arg5: memref<3x3x4x4xf32, #tpu.memory_space<vmem>>, %arg6: memref<1x4xf32, #tpu.memory_space<vmem>>, %arg7: memref<1x4x16x4xf32, #tpu.memory_space<vmem>>, %arg8: memref<4x16x4xf32, #tpu.memory_space<vmem>>) attributes {dimension_semantics = [#tpu.dimension_semantics<parallel>, #tpu.dimension_semantics<parallel>], iteration_bounds = array<i64: 2, 4>, scalar_prefetch = 0 : i64, scratch_operands = 1 : i64, tpu.core_type = #tpu.core_type<tc>, window_params = [{transform_indices = @transform_0, window_bounds = array<i64: 1, 4, 16, 4>}, {transform_indices = @transform_1, window_bounds = array<i64: 1, 1, 16, 4>}, {transform_indices = @transform_2, window_bounds = array<i64: 1, 1, 16, 4>}, {pipeline_mode = #tpu.pipeline_mode<synchronous>, transform_indices = @transform_3, window_bounds = array<i64: 3, 3, 4, 4>}, {pipeline_mode = #tpu.pipeline_mode<synchronous>, transform_indices = @transform_4, window_bounds = array<i64: 1, 4>}, {transform_indices = @transform_5, window_bounds = array<i64: 1, 4, 16, 4>}]} {
    %c0 = arith.constant 0 : index
    %c0_0 = arith.constant 0 : index
    %c0_1 = arith.constant 0 : index
    %c0_2 = arith.constant 0 : index
    %0 = vector.load %arg2[%c0, %c0_0, %c0_1, %c0_2] : memref<1x4x16x4xf32, #tpu.memory_space<vmem>>, vector<1x4x16x4xf32>
    %1 = vector.shape_cast %0 : vector<1x4x16x4xf32> to vector<4x16x4xf32>
    %2 = vector.shape_cast %1 : vector<4x16x4xf32> to vector<64x4xf32>
    %cst = arith.constant 0.000000e+00 : f32
    %3 = vector.broadcast %cst : f32 to vector<4x16x4xf32>
    %c0_3 = arith.constant 0 : index
    %c0_4 = arith.constant 0 : index
    %c0_5 = arith.constant 0 : index
    %4 = vector.load %arg8[%c0_3, %c0_4, %c0_5] : memref<4x16x4xf32, #tpu.memory_space<vmem>>, vector<4x16x4xf32>
    tpu.vector_store %arg8[%c0_3, %c0_4, %c0_5], %3 {strides = array<i32>} : memref<4x16x4xf32, #tpu.memory_space<vmem>>, vector<4x16x4xf32>,
    %c0_6 = arith.constant 0 : index
    %c0_7 = arith.constant 0 : index
    %c0_8 = arith.constant 0 : index
    %c0_9 = arith.constant 0 : index
    %5 = vector.load %arg5[%c0_6, %c0_7, %c0_8, %c0_9] : memref<3x3x4x4xf32, #tpu.memory_space<vmem>>, vector<1x1x4x4xf32>
    %6 = vector.shape_cast %5 : vector<1x1x4x4xf32> to vector<4x4xf32>
    %cst_10 = arith.constant dense<0.000000e+00> : vector<64x4xf32>
    %7 = tpu.matmul %2, %6, %cst_10 {dimension_numbers = #tpu.dot_dimension_numbers<[1], [0], [0], [1], [0, 0, 1, 1], [], []>} : vector<64x4xf32>, vector<4x4xf32>, vector<64x4xf32> -> vector<64x4xf32>
    %8 = vector.shape_cast %7 : vector<64x4xf32> to vector<4x16x4xf32>
    %c1 = arith.constant 1 : index
    %c1_11 = arith.constant 1 : index
    %c0_12 = arith.constant 0 : index
    %9 = vector.load %arg8[%c1, %c1_11, %c0_12] : memref<4x16x4xf32, #tpu.memory_space<vmem>>, vector<3x15x4xf32>
    %10 = vector.extract_strided_slice %8 {offsets = [0, 0, 0], sizes = [3, 15, 4], strides = [1, 1, 1]} : vector<4x16x4xf32> to vector<3x15x4xf32>
    %11 = arith.addf %9, %10 : vector<3x15x4xf32>
    %c1_13 = arith.constant 1 : index
    %c1_14 = arith.constant 1 : index
    %c0_15 = arith.constant 0 : index
    %12 = vector.load %arg8[%c1_13, %c1_14, %c0_15] : memref<4x16x4xf32, #tpu.memory_space<vmem>>, vector<3x15x4xf32>
    tpu.vector_store %arg8[%c1_13, %c1_14, %c0_15], %11 {strides = array<i32>} : memref<4x16x4xf32, #tpu.memory_space<vmem>>, vector<3x15x4xf32>,
    %c0_16 = arith.constant 0 : index
    %c1_17 = arith.constant 1 : index
    %c0_18 = arith.constant 0 : index
    %c0_19 = arith.constant 0 : index
    %13 = vector.load %arg5[%c0_16, %c1_17, %c0_18, %c0_19] : memref<3x3x4x4xf32, #tpu.memory_space<vmem>>, vector<1x1x4x4xf32>
    %14 = vector.shape_cast %13 : vector<1x1x4x4xf32> to vector<4x4xf32>
    %cst_20 = arith.constant dense<0.000000e+00> : vector<64x4xf32>
    %15 = tpu.matmul %2, %14, %cst_20 {dimension_numbers = #tpu.dot_dimension_numbers<[1], [0], [0], [1], [0, 0, 1, 1], [], []>} : vector<64x4xf32>, vector<4x4xf32>, vector<64x4xf32> -> vector<64x4xf32>
    %16 = vector.shape_cast %15 : vector<64x4xf32> to vector<4x16x4xf32>
    %c1_21 = arith.constant 1 : index
    %c0_22 = arith.constant 0 : index
    %c0_23 = arith.constant 0 : index
    %17 = vector.load %arg8[%c1_21, %c0_22, %c0_23] : memref<4x16x4xf32, #tpu.memory_space<vmem>>, vector<3x16x4xf32>
    %18 = vector.extract_strided_slice %16 {offsets = [0, 0, 0], sizes = [3, 16, 4], strides = [1, 1, 1]} : vector<4x16x4xf32> to vector<3x16x4xf32>
    %19 = arith.addf %17, %18 : vector<3x16x4xf32>
    %c1_24 = arith.constant 1 : index
    %c0_25 = arith.constant 0 : index
    %c0_26 = arith.constant 0 : index
    %20 = vector.load %arg8[%c1_24, %c0_25, %c0_26] : memref<4x16x4xf32, #tpu.memory_space<vmem>>, vector<3x16x4xf32>
    tpu.vector_store %arg8[%c1_24, %c0_25, %c0_26], %19 {strides = array<i32>} : memref<4x16x4xf32, #tpu.memory_space<vmem>>, vector<3x16x4xf32>,
    %c0_27 = arith.constant 0 : index
    %c2 = arith.constant 2 : index
    %c0_28 = arith.constant 0 : index
    %c0_29 = arith.constant 0 : index
    %21 = vector.load %arg5[%c0_27, %c2, %c0_28, %c0_29] : memref<3x3x4x4xf32, #tpu.memory_space<vmem>>, vector<1x1x4x4xf32>
    %22 = vector.shape_cast %21 : vector<1x1x4x4xf32> to vector<4x4xf32>
    %cst_30 = arith.constant dense<0.000000e+00> : vector<64x4xf32>
    %23 = tpu.matmul %2, %22, %cst_30 {dimension_numbers = #tpu.dot_dimension_numbers<[1], [0], [0], [1], [0, 0, 1, 1], [], []>} : vector<64x4xf32>, vector<4x4xf32>, vector<64x4xf32> -> vector<64x4xf32>
    %24 = vector.shape_cast %23 : vector<64x4xf32> to vector<4x16x4xf32>
    %c1_31 = arith.constant 1 : index
    %c0_32 = arith.constant 0 : index
    %c0_33 = arith.constant 0 : index
    %25 = vector.load %arg8[%c1_31, %c0_32, %c0_33] : memref<4x16x4xf32, #tpu.memory_space<vmem>>, vector<3x15x4xf32>
    %26 = vector.extract_strided_slice %24 {offsets = [0, 1, 0], sizes = [3, 15, 4], strides = [1, 1, 1]} : vector<4x16x4xf32> to vector<3x15x4xf32>
    %27 = arith.addf %25, %26 : vector<3x15x4xf32>
    %c1_34 = arith.constant 1 : index
    %c0_35 = arith.constant 0 : index
    %c0_36 = arith.constant 0 : index
    %28 = vector.load %arg8[%c1_34, %c0_35, %c0_36] : memref<4x16x4xf32, #tpu.memory_space<vmem>>, vector<3x15x4xf32>
    tpu.vector_store %arg8[%c1_34, %c0_35, %c0_36], %27 {strides = array<i32>} : memref<4x16x4xf32, #tpu.memory_space<vmem>>, vector<3x15x4xf32>,
    %c1_37 = arith.constant 1 : index
    %c0_38 = arith.constant 0 : index
    %c0_39 = arith.constant 0 : index
    %c0_40 = arith.constant 0 : index
    %29 = vector.load %arg5[%c1_37, %c0_38, %c0_39, %c0_40] : memref<3x3x4x4xf32, #tpu.memory_space<vmem>>, vector<1x1x4x4xf32>
    %30 = vector.shape_cast %29 : vector<1x1x4x4xf32> to vector<4x4xf32>
    %cst_41 = arith.constant dense<0.000000e+00> : vector<64x4xf32>
    %31 = tpu.matmul %2, %30, %cst_41 {dimension_numbers = #tpu.dot_dimension_numbers<[1], [0], [0], [1], [0, 0, 1, 1], [], []>} : vector<64x4xf32>, vector<4x4xf32>, vector<64x4xf32> -> vector<64x4xf32>
    %32 = vector.shape_cast %31 : vector<64x4xf32> to vector<4x16x4xf32>
    %c0_42 = arith.constant 0 : index
    %c1_43 = arith.constant 1 : index
    %c0_44 = arith.constant 0 : index
    %33 = vector.load %arg8[%c0_42, %c1_43, %c0_44] : memref<4x16x4xf32, #tpu.memory_space<vmem>>, vector<4x15x4xf32>
    %34 = vector.extract_strided_slice %32 {offsets = [0, 0, 0], sizes = [4, 15, 4], strides = [1, 1, 1]} : vector<4x16x4xf32> to vector<4x15x4xf32>
    %35 = arith.addf %33, %34 : vector<4x15x4xf32>
    %c0_45 = arith.constant 0 : index
    %c1_46 = arith.constant 1 : index
    %c0_47 = arith.constant 0 : index
    %36 = vector.load %arg8[%c0_45, %c1_46, %c0_47] : memref<4x16x4xf32, #tpu.memory_space<vmem>>, vector<4x15x4xf32>
    tpu.vector_store %arg8[%c0_45, %c1_46, %c0_47], %35 {strides = array<i32>} : memref<4x16x4xf32, #tpu.memory_space<vmem>>, vector<4x15x4xf32>,
    %c1_48 = arith.constant 1 : index
    %c1_49 = arith.constant 1 : index
    %c0_50 = arith.constant 0 : index
    %c0_51 = arith.constant 0 : index
    %37 = vector.load %arg5[%c1_48, %c1_49, %c0_50, %c0_51] : memref<3x3x4x4xf32, #tpu.memory_space<vmem>>, vector<1x1x4x4xf32>
    %38 = vector.shape_cast %37 : vector<1x1x4x4xf32> to vector<4x4xf32>
    %cst_52 = arith.constant dense<0.000000e+00> : vector<64x4xf32>
    %39 = tpu.matmul %2, %38, %cst_52 {dimension_numbers = #tpu.dot_dimension_numbers<[1], [0], [0], [1], [0, 0, 1, 1], [], []>} : vector<64x4xf32>, vector<4x4xf32>, vector<64x4xf32> -> vector<64x4xf32>
    %40 = vector.shape_cast %39 : vector<64x4xf32> to vector<4x16x4xf32>
    %c0_53 = arith.constant 0 : index
    %c0_54 = arith.constant 0 : index
    %c0_55 = arith.constant 0 : index
    %41 = vector.load %arg8[%c0_53, %c0_54, %c0_55] : memref<4x16x4xf32, #tpu.memory_space<vmem>>, vector<4x16x4xf32>
    %42 = arith.addf %41, %40 : vector<4x16x4xf32>
    %c0_56 = arith.constant 0 : index
    %c0_57 = arith.constant 0 : index
    %c0_58 = arith.constant 0 : index
    %43 = vector.load %arg8[%c0_56, %c0_57, %c0_58] : memref<4x16x4xf32, #tpu.memory_space<vmem>>, vector<4x16x4xf32>
    tpu.vector_store %arg8[%c0_56, %c0_57, %c0_58], %42 {strides = array<i32>} : memref<4x16x4xf32, #tpu.memory_space<vmem>>, vector<4x16x4xf32>,
    %c1_59 = arith.constant 1 : index
    %c2_60 = arith.constant 2 : index
    %c0_61 = arith.constant 0 : index
    %c0_62 = arith.constant 0 : index
    %44 = vector.load %arg5[%c1_59, %c2_60, %c0_61, %c0_62] : memref<3x3x4x4xf32, #tpu.memory_space<vmem>>, vector<1x1x4x4xf32>
    %45 = vector.shape_cast %44 : vector<1x1x4x4xf32> to vector<4x4xf32>
    %cst_63 = arith.constant dense<0.000000e+00> : vector<64x4xf32>
    %46 = tpu.matmul %2, %45, %cst_63 {dimension_numbers = #tpu.dot_dimension_numbers<[1], [0], [0], [1], [0, 0, 1, 1], [], []>} : vector<64x4xf32>, vector<4x4xf32>, vector<64x4xf32> -> vector<64x4xf32>
    %47 = vector.shape_cast %46 : vector<64x4xf32> to vector<4x16x4xf32>
    %c0_64 = arith.constant 0 : index
    %c0_65 = arith.constant 0 : index
    %c0_66 = arith.constant 0 : index
    %48 = vector.load %arg8[%c0_64, %c0_65, %c0_66] : memref<4x16x4xf32, #tpu.memory_space<vmem>>, vector<4x15x4xf32>
    %49 = vector.extract_strided_slice %47 {offsets = [0, 1, 0], sizes = [4, 15, 4], strides = [1, 1, 1]} : vector<4x16x4xf32> to vector<4x15x4xf32>
    %50 = arith.addf %48, %49 : vector<4x15x4xf32>
    %c0_67 = arith.constant 0 : index
    %c0_68 = arith.constant 0 : index
    %c0_69 = arith.constant 0 : index
    %51 = vector.load %arg8[%c0_67, %c0_68, %c0_69] : memref<4x16x4xf32, #tpu.memory_space<vmem>>, vector<4x15x4xf32>
    tpu.vector_store %arg8[%c0_67, %c0_68, %c0_69], %50 {strides = array<i32>} : memref<4x16x4xf32, #tpu.memory_space<vmem>>, vector<4x15x4xf32>,
    %c2_70 = arith.constant 2 : index
    %c0_71 = arith.constant 0 : index
    %c0_72 = arith.constant 0 : index
    %c0_73 = arith.constant 0 : index
    %52 = vector.load %arg5[%c2_70, %c0_71, %c0_72, %c0_73] : memref<3x3x4x4xf32, #tpu.memory_space<vmem>>, vector<1x1x4x4xf32>
    %53 = vector.shape_cast %52 : vector<1x1x4x4xf32> to vector<4x4xf32>
    %cst_74 = arith.constant dense<0.000000e+00> : vector<64x4xf32>
    %54 = tpu.matmul %2, %53, %cst_74 {dimension_numbers = #tpu.dot_dimension_numbers<[1], [0], [0], [1], [0, 0, 1, 1], [], []>} : vector<64x4xf32>, vector<4x4xf32>, vector<64x4xf32> -> vector<64x4xf32>
    %55 = vector.shape_cast %54 : vector<64x4xf32> to vector<4x16x4xf32>
    %c0_75 = arith.constant 0 : index
    %c1_76 = arith.constant 1 : index
    %c0_77 = arith.constant 0 : index
    %56 = vector.load %arg8[%c0_75, %c1_76, %c0_77] : memref<4x16x4xf32, #tpu.memory_space<vmem>>, vector<3x15x4xf32>
    %57 = vector.extract_strided_slice %55 {offsets = [1, 0, 0], sizes = [3, 15, 4], strides = [1, 1, 1]} : vector<4x16x4xf32> to vector<3x15x4xf32>
    %58 = arith.addf %56, %57 : vector<3x15x4xf32>
    %c0_78 = arith.constant 0 : index
    %c1_79 = arith.constant 1 : index
    %c0_80 = arith.constant 0 : index
    %59 = vector.load %arg8[%c0_78, %c1_79, %c0_80] : memref<4x16x4xf32, #tpu.memory_space<vmem>>, vector<3x15x4xf32>
    tpu.vector_store %arg8[%c0_78, %c1_79, %c0_80], %58 {strides = array<i32>} : memref<4x16x4xf32, #tpu.memory_space<vmem>>, vector<3x15x4xf32>,
    %c2_81 = arith.constant 2 : index
    %c1_82 = arith.constant 1 : index
    %c0_83 = arith.constant 0 : index
    %c0_84 = arith.constant 0 : index
    %60 = vector.load %arg5[%c2_81, %c1_82, %c0_83, %c0_84] : memref<3x3x4x4xf32, #tpu.memory_space<vmem>>, vector<1x1x4x4xf32>
    %61 = vector.shape_cast %60 : vector<1x1x4x4xf32> to vector<4x4xf32>
    %cst_85 = arith.constant dense<0.000000e+00> : vector<64x4xf32>
    %62 = tpu.matmul %2, %61, %cst_85 {dimension_numbers = #tpu.dot_dimension_numbers<[1], [0], [0], [1], [0, 0, 1, 1], [], []>} : vector<64x4xf32>, vector<4x4xf32>, vector<64x4xf32> -> vector<64x4xf32>
    %63 = vector.shape_cast %62 : vector<64x4xf32> to vector<4x16x4xf32>
    %c0_86 = arith.constant 0 : index
    %c0_87 = arith.constant 0 : index
    %c0_88 = arith.constant 0 : index
    %64 = vector.load %arg8[%c0_86, %c0_87, %c0_88] : memref<4x16x4xf32, #tpu.memory_space<vmem>>, vector<3x16x4xf32>
    %65 = vector.extract_strided_slice %63 {offsets = [1, 0, 0], sizes = [3, 16, 4], strides = [1, 1, 1]} : vector<4x16x4xf32> to vector<3x16x4xf32>
    %66 = arith.addf %64, %65 : vector<3x16x4xf32>
    %c0_89 = arith.constant 0 : index
    %c0_90 = arith.constant 0 : index
    %c0_91 = arith.constant 0 : index
    %67 = vector.load %arg8[%c0_89, %c0_90, %c0_91] : memref<4x16x4xf32, #tpu.memory_space<vmem>>, vector<3x16x4xf32>
    tpu.vector_store %arg8[%c0_89, %c0_90, %c0_91], %66 {strides = array<i32>} : memref<4x16x4xf32, #tpu.memory_space<vmem>>, vector<3x16x4xf32>,
    %c2_92 = arith.constant 2 : index
    %c2_93 = arith.constant 2 : index
    %c0_94 = arith.constant 0 : index
    %c0_95 = arith.constant 0 : index
    %68 = vector.load %arg5[%c2_92, %c2_93, %c0_94, %c0_95] : memref<3x3x4x4xf32, #tpu.memory_space<vmem>>, vector<1x1x4x4xf32>
    %69 = vector.shape_cast %68 : vector<1x1x4x4xf32> to vector<4x4xf32>
    %cst_96 = arith.constant dense<0.000000e+00> : vector<64x4xf32>
    %70 = tpu.matmul %2, %69, %cst_96 {dimension_numbers = #tpu.dot_dimension_numbers<[1], [0], [0], [1], [0, 0, 1, 1], [], []>} : vector<64x4xf32>, vector<4x4xf32>, vector<64x4xf32> -> vector<64x4xf32>
    %71 = vector.shape_cast %70 : vector<64x4xf32> to vector<4x16x4xf32>
    %c0_97 = arith.constant 0 : index
    %c0_98 = arith.constant 0 : index
    %c0_99 = arith.constant 0 : index
    %72 = vector.load %arg8[%c0_97, %c0_98, %c0_99] : memref<4x16x4xf32, #tpu.memory_space<vmem>>, vector<3x15x4xf32>
    %73 = vector.extract_strided_slice %71 {offsets = [1, 1, 0], sizes = [3, 15, 4], strides = [1, 1, 1]} : vector<4x16x4xf32> to vector<3x15x4xf32>
    %74 = arith.addf %72, %73 : vector<3x15x4xf32>
    %c0_100 = arith.constant 0 : index
    %c0_101 = arith.constant 0 : index
    %c0_102 = arith.constant 0 : index
    %75 = vector.load %arg8[%c0_100, %c0_101, %c0_102] : memref<4x16x4xf32, #tpu.memory_space<vmem>>, vector<3x15x4xf32>
    tpu.vector_store %arg8[%c0_100, %c0_101, %c0_102], %74 {strides = array<i32>} : memref<4x16x4xf32, #tpu.memory_space<vmem>>, vector<3x15x4xf32>,
    %c0_i32 = arith.constant 0 : i32
    %76 = arith.cmpi sgt, %arg1, %c0_i32 : i32
    %77 = arith.extui %76 : i1 to i32
    %c0_i32_103 = arith.constant 0 : i32
    %78 = arith.cmpi ne, %77, %c0_i32_103 : i32
    scf.if %78 {
      %c0_119 = arith.constant 0 : index
      %c0_120 = arith.constant 0 : index
      %c0_121 = arith.constant 0 : index
      %c0_122 = arith.constant 0 : index
      %95 = vector.load %arg3[%c0_119, %c0_120, %c0_121, %c0_122] : memref<1x1x16x4xf32, #tpu.memory_space<vmem>>, vector<1x1x16x4xf32>
      %96 = vector.shape_cast %95 : vector<1x1x16x4xf32> to vector<16x4xf32>
      %c0_123 = arith.constant 0 : index
      %c0_124 = arith.constant 0 : index
      %c0_125 = arith.constant 0 : index
      %c0_126 = arith.constant 0 : index
      %97 = vector.load %arg5[%c0_123, %c0_124, %c0_125, %c0_126] : memref<3x3x4x4xf32, #tpu.memory_space<vmem>>, vector<1x1x4x4xf32>
      %98 = vector.shape_cast %97 : vector<1x1x4x4xf32> to vector<4x4xf32>
      %cst_127 = arith.constant dense<0.000000e+00> : vector<16x4xf32>
      %99 = tpu.matmul %96, %98, %cst_127 {dimension_numbers = #tpu.dot_dimension_numbers<[1], [0], [0], [1], [0, 0, 1, 1], [], []>} : vector<16x4xf32>, vector<4x4xf32>, vector<16x4xf32> -> vector<16x4xf32>
      %c0_128 = arith.constant 0 : index
      %c1_129 = arith.constant 1 : index
      %c0_130 = arith.constant 0 : index
      %100 = vector.load %arg8[%c0_128, %c1_129, %c0_130] : memref<4x16x4xf32, #tpu.memory_space<vmem>>, vector<1x15x4xf32>
      %101 = vector.extract_strided_slice %99 {offsets = [0, 0], sizes = [15, 4], strides = [1, 1]} : vector<16x4xf32> to vector<15x4xf32>
      %102 = vector.shape_cast %101 : vector<15x4xf32> to vector<1x15x4xf32>
      %103 = arith.addf %100, %102 : vector<1x15x4xf32>
      %c0_131 = arith.constant 0 : index
      %c1_132 = arith.constant 1 : index
      %c0_133 = arith.constant 0 : index
      %104 = vector.load %arg8[%c0_131, %c1_132, %c0_133] : memref<4x16x4xf32, #tpu.memory_space<vmem>>, vector<1x15x4xf32>
      tpu.vector_store %arg8[%c0_131, %c1_132, %c0_133], %103 {strides = array<i32>} : memref<4x16x4xf32, #tpu.memory_space<vmem>>, vector<1x15x4xf32>,
      %c0_134 = arith.constant 0 : index
      %c1_135 = arith.constant 1 : index
      %c0_136 = arith.constant 0 : index
      %c0_137 = arith.constant 0 : index
      %105 = vector.load %arg5[%c0_134, %c1_135, %c0_136, %c0_137] : memref<3x3x4x4xf32, #tpu.memory_space<vmem>>, vector<1x1x4x4xf32>
      %106 = vector.shape_cast %105 : vector<1x1x4x4xf32> to vector<4x4xf32>
      %cst_138 = arith.constant dense<0.000000e+00> : vector<16x4xf32>
      %107 = tpu.matmul %96, %106, %cst_138 {dimension_numbers = #tpu.dot_dimension_numbers<[1], [0], [0], [1], [0, 0, 1, 1], [], []>} : vector<16x4xf32>, vector<4x4xf32>, vector<16x4xf32> -> vector<16x4xf32>
      %c0_139 = arith.constant 0 : index
      %c0_140 = arith.constant 0 : index
      %c0_141 = arith.constant 0 : index
      %108 = vector.load %arg8[%c0_139, %c0_140, %c0_141] : memref<4x16x4xf32, #tpu.memory_space<vmem>>, vector<1x16x4xf32>
      %109 = vector.shape_cast %107 : vector<16x4xf32> to vector<1x16x4xf32>
      %110 = arith.addf %108, %109 : vector<1x16x4xf32>
      %c0_142 = arith.constant 0 : index
      %c0_143 = arith.constant 0 : index
      %c0_144 = arith.constant 0 : index
      %111 = vector.load %arg8[%c0_142, %c0_143, %c0_144] : memref<4x16x4xf32, #tpu.memory_space<vmem>>, vector<1x16x4xf32>
      tpu.vector_store %arg8[%c0_142, %c0_143, %c0_144], %110 {strides = array<i32>} : memref<4x16x4xf32, #tpu.memory_space<vmem>>, vector<1x16x4xf32>,
      %c0_145 = arith.constant 0 : index
      %c2_146 = arith.constant 2 : index
      %c0_147 = arith.constant 0 : index
      %c0_148 = arith.constant 0 : index
      %112 = vector.load %arg5[%c0_145, %c2_146, %c0_147, %c0_148] : memref<3x3x4x4xf32, #tpu.memory_space<vmem>>, vector<1x1x4x4xf32>
      %113 = vector.shape_cast %112 : vector<1x1x4x4xf32> to vector<4x4xf32>
      %cst_149 = arith.constant dense<0.000000e+00> : vector<16x4xf32>
      %114 = tpu.matmul %96, %113, %cst_149 {dimension_numbers = #tpu.dot_dimension_numbers<[1], [0], [0], [1], [0, 0, 1, 1], [], []>} : vector<16x4xf32>, vector<4x4xf32>, vector<16x4xf32> -> vector<16x4xf32>
      %c0_150 = arith.constant 0 : index
      %c0_151 = arith.constant 0 : index
      %c0_152 = arith.constant 0 : index
      %115 = vector.load %arg8[%c0_150, %c0_151, %c0_152] : memref<4x16x4xf32, #tpu.memory_space<vmem>>, vector<1x15x4xf32>
      %116 = vector.extract_strided_slice %114 {offsets = [1, 0], sizes = [15, 4], strides = [1, 1]} : vector<16x4xf32> to vector<15x4xf32>
      %117 = vector.shape_cast %116 : vector<15x4xf32> to vector<1x15x4xf32>
      %118 = arith.addf %115, %117 : vector<1x15x4xf32>
      %c0_153 = arith.constant 0 : index
      %c0_154 = arith.constant 0 : index
      %c0_155 = arith.constant 0 : index
      %119 = vector.load %arg8[%c0_153, %c0_154, %c0_155] : memref<4x16x4xf32, #tpu.memory_space<vmem>>, vector<1x15x4xf32>
      tpu.vector_store %arg8[%c0_153, %c0_154, %c0_155], %118 {strides = array<i32>} : memref<4x16x4xf32, #tpu.memory_space<vmem>>, vector<1x15x4xf32>,
    } else {
    }
    %c3_i32 = arith.constant 3 : i32
    %79 = arith.cmpi slt, %arg1, %c3_i32 : i32
    %80 = arith.extui %79 : i1 to i32
    %c0_i32_104 = arith.constant 0 : i32
    %81 = arith.cmpi ne, %80, %c0_i32_104 : i32
    scf.if %81 {
      %c0_119 = arith.constant 0 : index
      %c0_120 = arith.constant 0 : index
      %c0_121 = arith.constant 0 : index
      %c0_122 = arith.constant 0 : index
      %95 = vector.load %arg4[%c0_119, %c0_120, %c0_121, %c0_122] : memref<1x1x16x4xf32, #tpu.memory_space<vmem>>, vector<1x1x16x4xf32>
      %96 = vector.shape_cast %95 : vector<1x1x16x4xf32> to vector<16x4xf32>
      %c2_123 = arith.constant 2 : index
      %c0_124 = arith.constant 0 : index
      %c0_125 = arith.constant 0 : index
      %c0_126 = arith.constant 0 : index
      %97 = vector.load %arg5[%c2_123, %c0_124, %c0_125, %c0_126] : memref<3x3x4x4xf32, #tpu.memory_space<vmem>>, vector<1x1x4x4xf32>
      %98 = vector.shape_cast %97 : vector<1x1x4x4xf32> to vector<4x4xf32>
      %cst_127 = arith.constant dense<0.000000e+00> : vector<16x4xf32>
      %99 = tpu.matmul %96, %98, %cst_127 {dimension_numbers = #tpu.dot_dimension_numbers<[1], [0], [0], [1], [0, 0, 1, 1], [], []>} : vector<16x4xf32>, vector<4x4xf32>, vector<16x4xf32> -> vector<16x4xf32>
      %c3 = arith.constant 3 : index
      %c1_128 = arith.constant 1 : index
      %c0_129 = arith.constant 0 : index
      %100 = vector.load %arg8[%c3, %c1_128, %c0_129] : memref<4x16x4xf32, #tpu.memory_space<vmem>>, vector<1x15x4xf32>
      %101 = vector.extract_strided_slice %99 {offsets = [0, 0], sizes = [15, 4], strides = [1, 1]} : vector<16x4xf32> to vector<15x4xf32>
      %102 = vector.shape_cast %101 : vector<15x4xf32> to vector<1x15x4xf32>
      %103 = arith.addf %100, %102 : vector<1x15x4xf32>
      %c3_130 = arith.constant 3 : index
      %c1_131 = arith.constant 1 : index
      %c0_132 = arith.constant 0 : index
      %104 = vector.load %arg8[%c3_130, %c1_131, %c0_132] : memref<4x16x4xf32, #tpu.memory_space<vmem>>, vector<1x15x4xf32>
      tpu.vector_store %arg8[%c3_130, %c1_131, %c0_132], %103 {strides = array<i32>} : memref<4x16x4xf32, #tpu.memory_space<vmem>>, vector<1x15x4xf32>,
      %c2_133 = arith.constant 2 : index
      %c1_134 = arith.constant 1 : index
      %c0_135 = arith.constant 0 : index
      %c0_136 = arith.constant 0 : index
      %105 = vector.load %arg5[%c2_133, %c1_134, %c0_135, %c0_136] : memref<3x3x4x4xf32, #tpu.memory_space<vmem>>, vector<1x1x4x4xf32>
      %106 = vector.shape_cast %105 : vector<1x1x4x4xf32> to vector<4x4xf32>
      %cst_137 = arith.constant dense<0.000000e+00> : vector<16x4xf32>
      %107 = tpu.matmul %96, %106, %cst_137 {dimension_numbers = #tpu.dot_dimension_numbers<[1], [0], [0], [1], [0, 0, 1, 1], [], []>} : vector<16x4xf32>, vector<4x4xf32>, vector<16x4xf32> -> vector<16x4xf32>
      %c3_138 = arith.constant 3 : index
      %c0_139 = arith.constant 0 : index
      %c0_140 = arith.constant 0 : index
      %108 = vector.load %arg8[%c3_138, %c0_139, %c0_140] : memref<4x16x4xf32, #tpu.memory_space<vmem>>, vector<1x16x4xf32>
      %109 = vector.shape_cast %107 : vector<16x4xf32> to vector<1x16x4xf32>
      %110 = arith.addf %108, %109 : vector<1x16x4xf32>
      %c3_141 = arith.constant 3 : index
      %c0_142 = arith.constant 0 : index
      %c0_143 = arith.constant 0 : index
      %111 = vector.load %arg8[%c3_141, %c0_142, %c0_143] : memref<4x16x4xf32, #tpu.memory_space<vmem>>, vector<1x16x4xf32>
      tpu.vector_store %arg8[%c3_141, %c0_142, %c0_143], %110 {strides = array<i32>} : memref<4x16x4xf32, #tpu.memory_space<vmem>>, vector<1x16x4xf32>,
      %c2_144 = arith.constant 2 : index
      %c2_145 = arith.constant 2 : index
      %c0_146 = arith.constant 0 : index
      %c0_147 = arith.constant 0 : index
      %112 = vector.load %arg5[%c2_144, %c2_145, %c0_146, %c0_147] : memref<3x3x4x4xf32, #tpu.memory_space<vmem>>, vector<1x1x4x4xf32>
      %113 = vector.shape_cast %112 : vector<1x1x4x4xf32> to vector<4x4xf32>
      %cst_148 = arith.constant dense<0.000000e+00> : vector<16x4xf32>
      %114 = tpu.matmul %96, %113, %cst_148 {dimension_numbers = #tpu.dot_dimension_numbers<[1], [0], [0], [1], [0, 0, 1, 1], [], []>} : vector<16x4xf32>, vector<4x4xf32>, vector<16x4xf32> -> vector<16x4xf32>
      %c3_149 = arith.constant 3 : index
      %c0_150 = arith.constant 0 : index
      %c0_151 = arith.constant 0 : index
      %115 = vector.load %arg8[%c3_149, %c0_150, %c0_151] : memref<4x16x4xf32, #tpu.memory_space<vmem>>, vector<1x15x4xf32>
      %116 = vector.extract_strided_slice %114 {offsets = [1, 0], sizes = [15, 4], strides = [1, 1]} : vector<16x4xf32> to vector<15x4xf32>
      %117 = vector.shape_cast %116 : vector<15x4xf32> to vector<1x15x4xf32>
      %118 = arith.addf %115, %117 : vector<1x15x4xf32>
      %c3_152 = arith.constant 3 : index
      %c0_153 = arith.constant 0 : index
      %c0_154 = arith.constant 0 : index
      %119 = vector.load %arg8[%c3_152, %c0_153, %c0_154] : memref<4x16x4xf32, #tpu.memory_space<vmem>>, vector<1x15x4xf32>
      tpu.vector_store %arg8[%c3_152, %c0_153, %c0_154], %118 {strides = array<i32>} : memref<4x16x4xf32, #tpu.memory_space<vmem>>, vector<1x15x4xf32>,
    } else {
    }
    %c0_105 = arith.constant 0 : index
    %c0_106 = arith.constant 0 : index
    %c0_107 = arith.constant 0 : index
    %82 = vector.load %arg8[%c0_105, %c0_106, %c0_107] : memref<4x16x4xf32, #tpu.memory_space<vmem>>, vector<4x16x4xf32>
    %c0_108 = arith.constant 0 : index
    %c0_109 = arith.constant 0 : index
    %83 = vector.load %arg6[%c0_108, %c0_109] : memref<1x4xf32, #tpu.memory_space<vmem>>, vector<1x4xf32>
    %84 = vector.shape_cast %83 : vector<1x4xf32> to vector<1x1x4xf32>
    %85 = vector.broadcast %84 : vector<1x1x4xf32> to vector<4x16x4xf32>
    %86 = arith.addf %82, %85 : vector<4x16x4xf32>
    %cst_110 = arith.constant 0.000000e+00 : f32
    %87 = vector.broadcast %cst_110 : f32 to vector<4x16x4xf32>
    %88 = arith.maximumf %86, %87 : vector<4x16x4xf32>
    %c0_111 = arith.constant 0 : index
    %c0_112 = arith.constant 0 : index
    %c0_113 = arith.constant 0 : index
    %c0_114 = arith.constant 0 : index
    %89 = vector.load %arg2[%c0_111, %c0_112, %c0_113, %c0_114] : memref<1x4x16x4xf32, #tpu.memory_space<vmem>>, vector<1x4x16x4xf32>
    %90 = vector.shape_cast %89 : vector<1x4x16x4xf32> to vector<4x16x4xf32>
    %91 = arith.addf %90, %88 : vector<4x16x4xf32>
    %c0_115 = arith.constant 0 : index
    %c0_116 = arith.constant 0 : index
    %c0_117 = arith.constant 0 : index
    %c0_118 = arith.constant 0 : index
    %92 = vector.load %arg7[%c0_115, %c0_116, %c0_117, %c0_118] : memref<1x4x16x4xf32, #tpu.memory_space<vmem>>, vector<1x4x16x4xf32>
    %93 = vector.shape_cast %92 : vector<1x4x16x4xf32> to vector<4x16x4xf32>
    %94 = vector.shape_cast %91 : vector<4x16x4xf32> to vector<1x4x16x4xf32>
    tpu.vector_store %arg7[%c0_115, %c0_116, %c0_117, %c0_118], %94 {strides = array<i32>} : memref<1x4x16x4xf32, #tpu.memory_space<vmem>>, vector<1x4x16x4xf32>,
    return
  }
  func.func @transform_0(%arg0: i32, %arg1: i32) -> (i32, i32, i32, i32) {
    %c0_i32 = arith.constant 0 : i32
    %c0_i32_0 = arith.constant 0 : i32
    %c0_i32_1 = arith.constant 0 : i32
    return %arg0, %arg1, %c0_i32, %c0_i32_0 : i32, i32, i32, i32
  }
  func.func @transform_1(%arg0: i32, %arg1: i32) -> (i32, i32, i32, i32) {
    %c4_i32 = arith.constant 4 : i32
    %0 = arith.muli %arg1, %c4_i32 : i32
    %c1_i32 = arith.constant 1 : i32
    %1 = arith.subi %0, %c1_i32 : i32
    %c0_i32 = arith.constant 0 : i32
    %2 = arith.maxsi %1, %c0_i32 : i32
    %c0_i32_0 = arith.constant 0 : i32
    %c0_i32_1 = arith.constant 0 : i32
    %c0_i32_2 = arith.constant 0 : i32
    return %arg0, %2, %c0_i32_0, %c0_i32_1 : i32, i32, i32, i32
  }
  func.func @transform_2(%arg0: i32, %arg1: i32) -> (i32, i32, i32, i32) {
    %c4_i32 = arith.constant 4 : i32
    %0 = arith.muli %arg1, %c4_i32 : i32
    %c4_i32_0 = arith.constant 4 : i32
    %1 = arith.addi %0, %c4_i32_0 : i32
    %c15_i32 = arith.constant 15 : i32
    %2 = arith.minsi %1, %c15_i32 : i32
    %c0_i32 = arith.constant 0 : i32
    %c0_i32_1 = arith.constant 0 : i32
    %c0_i32_2 = arith.constant 0 : i32
    return %arg0, %2, %c0_i32, %c0_i32_1 : i32, i32, i32, i32
  }
  func.func @transform_3(%arg0: i32, %arg1: i32) -> (i32, i32, i32, i32) {
    %c0_i32 = arith.constant 0 : i32
    %c0_i32_0 = arith.constant 0 : i32
    %c0_i32_1 = arith.constant 0 : i32
    %c0_i32_2 = arith.constant 0 : i32
    %c0_i32_3 = arith.constant 0 : i32
    return %c0_i32, %c0_i32_0, %c0_i32_1, %c0_i32_2 : i32, i32, i32, i32
  }
  func.func @transform_4(%arg0: i32, %arg1: i32) -> (i32, i32) {
    %c0_i32 = arith.constant 0 : i32
    %c0_i32_0 = arith.constant 0 : i32
    %c0_i32_1 = arith.constant 0 : i32
    return %c0_i32, %c0_i32_0 : i32, i32
  }
  func.func @transform_5(%arg0: i32, %arg1: i32) -> (i32, i32, i32, i32) {
    %c0_i32 = arith.constant 0 : i32
    %c0_i32_0 = arith.constant 0 : i32
    %c0_i32_1 = arith.constant 0 : i32
    return %arg0, %arg1, %c0_i32, %c0_i32_0 : i32, i32, i32, i32
  }
}

</mosaic_0001>

<llo_original>
// kernel: tpu_custom_call.1
$region0: #{tpu_custom_call.1}
  #allocation0 [shape = 'u32[]', space=smem, size = 0x4, offset = 0x4, fixed_abs, tag = 'smem constant byte address 0x4 - core index']
  #allocation1 [shape = 'u32[144,128]{1,0:T(1,128)}', space=vmem, size = 0x12000, scoped, tag = 'internal scratch']
  #allocation2 [shape = 'f32[4,16,4]{2,1,0:T(8,128)}', space=vmem, size = 0x8000, scoped, tag = 'scratch operand']
  %s0 = inlined_call_operand.vmem [shape: f32[2,16,16,4], index: 0, kind: input, shape index: {}]
  %s1 = inlined_call_operand.vmem [shape: f32[2,16,16,4], index: 1, kind: input, shape index: {}]
  %s2 = inlined_call_operand.vmem [shape: f32[2,16,16,4], index: 2, kind: input, shape index: {}]
  %s3 = inlined_call_operand.vmem [shape: f32[3,3,4,4], index: 3, kind: input, shape index: {}]
  %s4 = inlined_call_operand.vmem [shape: f32[1,4], index: 4, kind: input, shape index: {}]
  %s5 = inlined_call_operand.vmem [shape: f32[2,16,16,4], index: 5, kind: output, shape index: {}]
  %s6 = sld [smem:[#allocation0]]
  $region61: #{tpu_custom_call.1} parent=0
    _
  %s8 = ssub.s32 1, %s6
  %s9 = scalar_select 0, %s8, %s6
  loop: start=0, step=1, limit=10
  $region2: #{tpu_custom_call.1} parent=0 // loop_pre_header
    _
  $region3: #{tpu_custom_call.1} parent=0 // loop_header
    %s11 = sphi 0, %s15
    %p12 = scmp.ge.s32.totalorder %s11, 10
    %s18 = sphi 0, %s30
    %s19 = sphi 0, %s26
    %s20 = sphi 0, %s18
    %s21 = sphi 0, %s19
    %s22 = sphi 0, %s20
    %s23 = sphi 0, %s21
    %s35 = sphi 0, %s37
    %s38 = sphi 0, %s35
    %s39 = sphi 0, %s38
    %s55 = sphi 0, %s39
    %s71 = sphi 0, %s73
    %s74 = sphi 0, %s71
    %s75 = sphi 0, %s74
    %s91 = sphi 0, %s75
    %s107 = sphi 0, %s109
    %s110 = sphi 0, %s107
    %s111 = sphi 0, %s110
    %s127 = sphi 0, %s111
    %s131 = sphi 0, %s131
    %s133 = sphi 0, %s131
    %s134 = sphi 0, %s133
    %s148 = sphi 0, %s134
    %s152 = sphi 0, %s152
    %s154 = sphi 0, %s152
    %s155 = sphi 0, %s154
    %s169 = sphi 0, %s155
    %s177 = sphi 0, %s179
    %s180 = sphi 0, %s177
    %s181 = sphi 0, %s180
    %s197 = sphi 0, %s181
  $region4: #{tpu_custom_call.1} parent=0 // loop_header_branch
    %14 = sbr.rel (%p12) target = $region8
  $region5: #{tpu_custom_call.1} parent=0 // loop_body
    %s16 = ssub.s32 %s11, 1
    %s17 = ssub.s32 %s11, 2
    %s24 = sadd.s32 1, %s19
    %p25 = scmp.ge.s32.totalorder %s24, 4
    %s26 = scalar_select %p25, 0, %s24
    %s27 = sadd.s32 1, %s18
    %s28 = scalar_select %p25, %s27, %s18
    %p29 = scmp.ge.s32.totalorder %s28, 2
    %s30 = scalar_select %p29, 0, %s28
    %s31 = ssub.s32 %s18, %s30
    %s32 = ssub.s32 %s19, %s26
    %s33 = sor.u32 %s31, %s32
    %p34 = scmp.eq.s32.totalorder %s33, 0
    %s36 = sadd.s32 %s35, 1
    %s37 = scalar_select %p34, %s35, %s36
    %p40 = pneg %p34
    %p41 = scmp.eq.s32.totalorder %s11, 7
    %p42 = por %p40, %p41
    %p43 = scmp.ne.s32.totalorder %s35, %s38
    %p44 = scmp.eq.s32.totalorder %s11, 0
    %p45 = por %p43, %p44
    %p46 = scmp.ne.s32.totalorder %s35, %s38
    %p47 = scmp.eq.s32.totalorder %s16, 7
    %p48 = por %p46, %p47
    %p49 = scmp.ne.s32.totalorder %s38, %s39
    %p50 = scmp.eq.s32.totalorder %s16, 0
    %p51 = por %p49, %p50
    %p52 = scmp.ne.s32.totalorder %s38, %s39
    %p53 = scmp.eq.s32.totalorder %s17, 7
    %p54 = por %p52, %p53
    %p56 = scmp.ne.s32.totalorder %s39, %s55
    %p57 = scmp.eq.s32.totalorder %s17, 0
    %p58 = por %p56, %p57
    %s59 = smul.u32 %s19, 4
    %s60 = ssub.s32 %s59, 1
    %p61 = scmp.gt.s32.totalorder %s60, 0
    %s62 = scalar_select %p61, %s60, 0
    %s63 = smul.u32 %s26, 4
    %s64 = ssub.s32 %s63, 1
    %p65 = scmp.gt.s32.totalorder %s64, 0
    %s66 = scalar_select %p65, %s64, 0
    %s67 = ssub.s32 %s18, %s30
    %s68 = ssub.s32 %s62, %s66
    %s69 = sor.u32 %s67, %s68
    %p70 = scmp.eq.s32.totalorder %s69, 0
    %s72 = sadd.s32 %s71, 1
    %s73 = scalar_select %p70, %s71, %s72
    %p76 = pneg %p70
    %p77 = scmp.eq.s32.totalorder %s11, 7
    %p78 = por %p76, %p77
    %p79 = scmp.ne.s32.totalorder %s71, %s74
    %p80 = scmp.eq.s32.totalorder %s11, 0
    %p81 = por %p79, %p80
    %p82 = scmp.ne.s32.totalorder %s71, %s74
    %p83 = scmp.eq.s32.totalorder %s16, 7
    %p84 = por %p82, %p83
    %p85 = scmp.ne.s32.totalorder %s74, %s75
    %p86 = scmp.eq.s32.totalorder %s16, 0
    %p87 = por %p85, %p86
    %p88 = scmp.ne.s32.totalorder %s74, %s75
    %p89 = scmp.eq.s32.totalorder %s17, 7
    %p90 = por %p88, %p89
    %p92 = scmp.ne.s32.totalorder %s75, %s91
    %p93 = scmp.eq.s32.totalorder %s17, 0
    %p94 = por %p92, %p93
    %s95 = smul.u32 %s19, 4
    %s96 = sadd.s32 %s95, 4
    %p97 = scmp.lt.s32.totalorder %s96, 15
    %s98 = scalar_select %p97, %s96, 15
    %s99 = smul.u32 %s26, 4
    %s100 = sadd.s32 %s99, 4
    %p101 = scmp.lt.s32.totalorder %s100, 15
    %s102 = scalar_select %p101, %s100, 15
    %s103 = ssub.s32 %s18, %s30
    %s104 = ssub.s32 %s98, %s102
    %s105 = sor.u32 %s103, %s104
    %p106 = scmp.eq.s32.totalorder %s105, 0
    %s108 = sadd.s32 %s107, 1
    %s109 = scalar_select %p106, %s107, %s108
    %p112 = pneg %p106
    %p113 = scmp.eq.s32.totalorder %s11, 7
    %p114 = por %p112, %p113
    %p115 = scmp.ne.s32.totalorder %s107, %s110
    %p116 = scmp.eq.s32.totalorder %s11, 0
    %p117 = por %p115, %p116
    %p118 = scmp.ne.s32.totalorder %s107, %s110
    %p119 = scmp.eq.s32.totalorder %s16, 7
    %p120 = por %p118, %p119
    %p121 = scmp.ne.s32.totalorder %s110, %s111
    %p122 = scmp.eq.s32.totalorder %s16, 0
    %p123 = por %p121, %p122
    %p124 = scmp.ne.s32.totalorder %s110, %s111
    %p125 = scmp.eq.s32.totalorder %s17, 7
    %p126 = por %p124, %p125
    %p128 = scmp.ne.s32.totalorder %s111, %s127
    %p129 = scmp.eq.s32.totalorder %s17, 0
    %p130 = por %p128, %p129
    %s132 = sadd.s32 %s131, 1
    %p135 = scmp.eq.s32.totalorder %s11, 7
    %p136 = scmp.ne.s32.totalorder %s131, %s133
    %p137 = scmp.eq.s32.totalorder %s11, 0
    %p138 = por %p136, %p137
    %p139 = scmp.ne.s32.totalorder %s131, %s133
    %p140 = scmp.eq.s32.totalorder %s16, 7
    %p141 = por %p139, %p140
    %p142 = scmp.ne.s32.totalorder %s133, %s134
    %p143 = scmp.eq.s32.totalorder %s16, 0
    %p144 = por %p142, %p143
    %p145 = scmp.ne.s32.totalorder %s133, %s134
    %p146 = scmp.eq.s32.totalorder %s17, 7
    %p147 = por %p145, %p146
    %p149 = scmp.ne.s32.totalorder %s134, %s148
    %p150 = scmp.eq.s32.totalorder %s17, 0
    %p151 = por %p149, %p150
    %s153 = sadd.s32 %s152, 1
    %p156 = scmp.eq.s32.totalorder %s11, 7
    %p157 = scmp.ne.s32.totalorder %s152, %s154
    %p158 = scmp.eq.s32.totalorder %s11, 0
    %p159 = por %p157, %p158
    %p160 = scmp.ne.s32.totalorder %s152, %s154
    %p161 = scmp.eq.s32.totalorder %s16, 7
    %p162 = por %p160, %p161
    %p163 = scmp.ne.s32.totalorder %s154, %s155
    %p164 = scmp.eq.s32.totalorder %s16, 0
    %p165 = por %p163, %p164
    %p166 = scmp.ne.s32.totalorder %s154, %s155
    %p167 = scmp.eq.s32.totalorder %s17, 7
    %p168 = por %p166, %p167
    %p170 = scmp.ne.s32.totalorder %s155, %s169
    %p171 = scmp.eq.s32.totalorder %s17, 0
    %p172 = por %p170, %p171
    %s173 = ssub.s32 %s18, %s30
    %s174 = ssub.s32 %s19, %s26
    %s175 = sor.u32 %s173, %s174
    %p176 = scmp.eq.s32.totalorder %s175, 0
    %s178 = sadd.s32 %s177, 1
    %s179 = scalar_select %p176, %s177, %s178
    %p182 = pneg %p176
    %p183 = scmp.eq.s32.totalorder %s11, 7
    %p184 = por %p182, %p183
    %p185 = scmp.ne.s32.totalorder %s177, %s180
    %p186 = scmp.eq.s32.totalorder %s11, 0
    %p187 = por %p185, %p186
    %p188 = scmp.ne.s32.totalorder %s177, %s180
    %p189 = scmp.eq.s32.totalorder %s16, 7
    %p190 = por %p188, %p189
    %p191 = scmp.ne.s32.totalorder %s180, %s181
    %p192 = scmp.eq.s32.totalorder %s16, 0
    %p193 = por %p191, %p192
    %p194 = scmp.ne.s32.totalorder %s180, %s181
    %p195 = scmp.eq.s32.totalorder %s17, 7
    %p196 = por %p194, %p195
    %p198 = scmp.ne.s32.totalorder %s181, %s197
    %p199 = scmp.eq.s32.totalorder %s17, 0
    %p200 = por %p198, %p199
    %p201 = scmp.le.s32.totalorder 1, %s11
    %p202 = scmp.lt.s32.totalorder %s11, 9
    %p203 = pnand %p201, %p202
    %p204 = pneg %p203
    // Predicated region
    $region9: #{tpu_custom_call.1} parent=5 // pred_check
      _
    $region10: #{tpu_custom_call.1} parent=5 // pred_check_branch
      %206 = sbr.rel (%p203) target = $region12
    $region11: #{tpu_custom_call.1} parent=5 // pred_region
      %s207 = ssub.s32 %s11, 1
      // Predicated region
      $region13: #{tpu_custom_call.1} parent=11 // pred_check
        %p208 = pneg %p144
      $region14: #{tpu_custom_call.1} parent=11 // pred_check_branch
        %210 = sbr.rel (%p208) target = $region16
      $region15: #{tpu_custom_call.1} parent=11 // pred_region
        _
      $region16: #{tpu_custom_call.1} parent=11 // pred_fallthru
        _
      // Predicated region
      $region17: #{tpu_custom_call.1} parent=11 // pred_check
        %p211 = pneg %p165
      $region18: #{tpu_custom_call.1} parent=11 // pred_check_branch
        %213 = sbr.rel (%p211) target = $region20
      $region19: #{tpu_custom_call.1} parent=11 // pred_region
        _
      $region20: #{tpu_custom_call.1} parent=11 // pred_fallthru
        _
    $region12: #{tpu_custom_call.1} parent=5 // pred_fallthru
      _
    %p214 = scmp.lt.s32.totalorder %s11, 8
    // Predicated region
    $region21: #{tpu_custom_call.1} parent=5 // pred_check
      %p215 = pneg %p214
    $region22: #{tpu_custom_call.1} parent=5 // pred_check_branch
      %217 = sbr.rel (%p215) target = $region24
    $region23: #{tpu_custom_call.1} parent=5 // pred_region
      // Predicated region
      $region25: #{tpu_custom_call.1} parent=23 // pred_check
        %p218 = pneg %p45
      $region26: #{tpu_custom_call.1} parent=23 // pred_check_branch
        %220 = sbr.rel (%p218) target = $region28
      $region27: #{tpu_custom_call.1} parent=23 // pred_region
        %s221 = smul.u32 4, %s19
        %p222 = scmp.lt.s32.totalorder %s18, 1
        %s223 = scalar_select %p222, %s18, 1
        %p224 = scmp.lt.s32.totalorder %s221, 15
        %s225 = scalar_select %p224, %s221, 15
        %s226 = smul.addr %s225, 2
        %s227 = smul.addr %s223, 32
        %s228 = sadd.s32 %s226, %s227
        %s229 = smul.addr %s228, 8
        %s230 = scalar_lea.vmem %s0, %s229
        %s231 = smul.u32 4, %s19
      $region28: #{tpu_custom_call.1} parent=23 // pred_fallthru
        _
      // Predicated region
      $region29: #{tpu_custom_call.1} parent=23 // pred_check
        %p232 = pneg %p81
      $region30: #{tpu_custom_call.1} parent=23 // pred_check_branch
        %234 = sbr.rel (%p232) target = $region32
      $region31: #{tpu_custom_call.1} parent=23 // pred_region
        %s235 = smul.u32 %s19, 4
        %s236 = ssub.s32 %s235, 1
        %p237 = scmp.gt.s32.totalorder %s236, 0
        %s238 = scalar_select %p237, %s236, 0
        %p239 = scmp.lt.s32.totalorder %s18, 1
        %s240 = scalar_select %p239, %s18, 1
        %p241 = scmp.lt.s32.totalorder %s238, 15
        %s242 = scalar_select %p241, %s238, 15
        %s243 = smul.addr %s242, 2
        %s244 = smul.addr %s240, 32
        %s245 = sadd.s32 %s243, %s244
        %s246 = smul.addr %s245, 8
        %s247 = scalar_lea.vmem %s1, %s246
        %s248 = smul.u32 %s19, 4
        %s249 = ssub.s32 %s248, 1
        %p250 = scmp.gt.s32.totalorder %s249, 0
        %s251 = scalar_select %p250, %s249, 0
      $region32: #{tpu_custom_call.1} parent=23 // pred_fallthru
        _
      // Predicated region
      $region33: #{tpu_custom_call.1} parent=23 // pred_check
        %p252 = pneg %p117
      $region34: #{tpu_custom_call.1} parent=23 // pred_check_branch
        %254 = sbr.rel (%p252) target = $region36
      $region35: #{tpu_custom_call.1} parent=23 // pred_region
        %s255 = smul.u32 %s19, 4
        %s256 = sadd.s32 %s255, 4
        %p257 = scmp.lt.s32.totalorder %s256, 15
        %s258 = scalar_select %p257, %s256, 15
        %p259 = scmp.lt.s32.totalorder %s18, 1
        %s260 = scalar_select %p259, %s18, 1
        %p261 = scmp.lt.s32.totalorder %s258, 15
        %s262 = scalar_select %p261, %s258, 15
        %s263 = smul.addr %s262, 2
        %s264 = smul.addr %s260, 32
        %s265 = sadd.s32 %s263, %s264
        %s266 = smul.addr %s265, 8
        %s267 = scalar_lea.vmem %s2, %s266
        %s268 = smul.u32 %s19, 4
        %s269 = sadd.s32 %s268, 4
        %p270 = scmp.lt.s32.totalorder %s269, 15
        %s271 = scalar_select %p270, %s269, 15
      $region36: #{tpu_custom_call.1} parent=23 // pred_fallthru
        _
    $region24: #{tpu_custom_call.1} parent=5 // pred_fallthru
      _
    %p272 = scmp.le.s32.totalorder 1, %s11
    %p273 = scmp.lt.s32.totalorder %s11, 9
    %p274 = pnand %p272, %p273
    %p275 = pneg %p274
    // Predicated region
    $region37: #{tpu_custom_call.1} parent=5 // pred_check
      _
    $region38: #{tpu_custom_call.1} parent=5 // pred_check_branch
      %277 = sbr.rel (%p274) target = $region40
    $region39: #{tpu_custom_call.1} parent=5 // pred_region
      %s278 = ssub.s32 %s11, 1
      %s279 = smul.u32 4, %s21
      %p280 = scmp.lt.s32.totalorder %s20, 1
      %s281 = scalar_select %p280, %s20, 1
      %p282 = scmp.lt.s32.totalorder %s279, 15
      %s283 = scalar_select %p282, %s279, 15
      %s284 = smul.addr %s283, 2
      %s285 = smul.addr %s281, 32
      %s286 = sadd.s32 %s284, %s285
      %s287 = smul.addr %s286, 8
      %s288 = scalar_lea.vmem %s0, %s287
      %p289 = pneg %p51
      %p290 = pneg %p48
      %s291 = smul.u32 %s21, 4
      %s292 = ssub.s32 %s291, 1
      %p293 = scmp.gt.s32.totalorder %s292, 0
      %s294 = scalar_select %p293, %s292, 0
      %p295 = scmp.lt.s32.totalorder %s20, 1
      %s296 = scalar_select %p295, %s20, 1
      %p297 = scmp.lt.s32.totalorder %s294, 15
      %s298 = scalar_select %p297, %s294, 15
      %s299 = smul.addr %s298, 2
      %s300 = smul.addr %s296, 32
      %s301 = sadd.s32 %s299, %s300
      %s302 = smul.addr %s301, 8
      %s303 = scalar_lea.vmem %s1, %s302
      %p304 = pneg %p87
      %p305 = pneg %p84
      %s306 = smul.u32 %s21, 4
      %s307 = sadd.s32 %s306, 4
      %p308 = scmp.lt.s32.totalorder %s307, 15
      %s309 = scalar_select %p308, %s307, 15
      %p310 = scmp.lt.s32.totalorder %s20, 1
      %s311 = scalar_select %p310, %s20, 1
      %p312 = scmp.lt.s32.totalorder %s309, 15
      %s313 = scalar_select %p312, %s309, 15
      %s314 = smul.addr %s313, 2
      %s315 = smul.addr %s311, 32
      %s316 = sadd.s32 %s314, %s315
      %s317 = smul.addr %s316, 8
      %s318 = scalar_lea.vmem %s2, %s317
      %p319 = pneg %p123
      %p320 = pneg %p120
      %p321 = pneg %p144
      %p322 = pneg %p141
      %p323 = pneg %p165
      %p324 = pneg %p162
      %p325 = pneg %p193
      %p326 = pneg %p190
      %s327 = smul.u32 4, %s21
      %p328 = scmp.lt.s32.totalorder %s20, 1
      %s329 = scalar_select %p328, %s20, 1
      %p330 = scmp.lt.s32.totalorder %s327, 15
      %s331 = scalar_select %p330, %s327, 15
      %s332 = smul.addr %s331, 2
      %s333 = smul.addr %s329, 32
      %s334 = sadd.s32 %s332, %s333
      %s335 = smul.addr %s334, 8
      %s336 = scalar_lea.vmem %s5, %s335
      %s337 = smul.u32 4, %s21
      %p338 = scmp.lt.s32.totalorder %s20, 1
      %s339 = scalar_select %p338, %s20, 1
      %p340 = scmp.lt.s32.totalorder %s337, 15
      %s341 = scalar_select %p340, %s337, 15
      %s342 = smul.addr %s341, 2
      %s343 = smul.addr %s339, 32
      %s344 = sadd.s32 %s342, %s343
      %s345 = smul.addr %s344, 8
      %s346 = scalar_lea.vmem %s0, %s345
      %s347 = smul.u32 4, %s21
      %s348 = smul.u32 %s21, 4
      %s349 = ssub.s32 %s348, 1
      %p350 = scmp.gt.s32.totalorder %s349, 0
      %s351 = scalar_select %p350, %s349, 0
      %p352 = scmp.lt.s32.totalorder %s20, 1
      %s353 = scalar_select %p352, %s20, 1
      %p354 = scmp.lt.s32.totalorder %s351, 15
      %s355 = scalar_select %p354, %s351, 15
      %s356 = smul.addr %s355, 2
      %s357 = smul.addr %s353, 32
      %s358 = sadd.s32 %s356, %s357
      %s359 = smul.addr %s358, 8
      %s360 = scalar_lea.vmem %s1, %s359
      %s361 = smul.u32 %s21, 4
      %s362 = ssub.s32 %s361, 1
      %p363 = scmp.gt.s32.totalorder %s362, 0
      %s364 = scalar_select %p363, %s362, 0
      %s365 = smul.u32 %s21, 4
      %s366 = sadd.s32 %s365, 4
      %p367 = scmp.lt.s32.totalorder %s366, 15
      %s368 = scalar_select %p367, %s366, 15
      %p369 = scmp.lt.s32.totalorder %s20, 1
      %s370 = scalar_select %p369, %s20, 1
      %p371 = scmp.lt.s32.totalorder %s368, 15
      %s372 = scalar_select %p371, %s368, 15
      %s373 = smul.addr %s372, 2
      %s374 = smul.addr %s370, 32
      %s375 = sadd.s32 %s373, %s374
      %s376 = smul.addr %s375, 8
      %s377 = scalar_lea.vmem %s2, %s376
      %s378 = smul.u32 %s21, 4
      %s379 = sadd.s32 %s378, 4
      %p380 = scmp.lt.s32.totalorder %s379, 15
      %s381 = scalar_select %p380, %s379, 15
      %s382 = smul.u32 4, %s21
      %p383 = scmp.lt.s32.totalorder %s20, 1
      %s384 = scalar_select %p383, %s20, 1
      %p385 = scmp.lt.s32.totalorder %s382, 15
      %s386 = scalar_select %p385, %s382, 15
      %s387 = smul.addr %s386, 2
      %s388 = smul.addr %s384, 32
      %s389 = sadd.s32 %s387, %s388
      %s390 = smul.addr %s389, 8
      %s391 = scalar_lea.vmem %s5, %s390
      %s392 = smul.u32 4, %s21
      %v393 = vld [vmem:[%s346] sm:$0xff]
      %v394 = vld [vmem:[%s346 + $0x8] sm:$0xff]
      %v395 = vld [vmem:[%s346 + $0x10] sm:$0xff]
      %v396 = vld [vmem:[%s346 + $0x18] sm:$0xff]
      %v397 = vld [vmem:[%s346 + $0x20] sm:$0xff]
      %v398 = vld [vmem:[%s346 + $0x28] sm:$0xff]
      %v399 = vld [vmem:[%s346 + $0x30] sm:$0xff]
      %v400 = vld [vmem:[%s346 + $0x38] sm:$0xff]
      %vm401 = vcmask 31744
      %402 = vst.msk [vmem:[#allocation2] sm:$0xff] %vm401, 0.0
      %403 = vst.msk [vmem:[#allocation2 + $0x8] sm:$0xff] %vm401, 0.0
      %404 = vst.msk [vmem:[#allocation2 + $0x10] sm:$0xff] %vm401, 0.0
      %405 = vst.msk [vmem:[#allocation2 + $0x18] sm:$0xff] %vm401, 0.0
      %406 = vst.msk [vmem:[#allocation2 + $0x20] sm:$0xff] %vm401, 0.0
      %407 = vst.msk [vmem:[#allocation2 + $0x28] sm:$0xff] %vm401, 0.0
      %408 = vst.msk [vmem:[#allocation2 + $0x30] sm:$0xff] %vm401, 0.0
      %409 = vst.msk [vmem:[#allocation2 + $0x38] sm:$0xff] %vm401, 0.0
      %v410 = vld [vmem:[%s3] sm:$0xf]
      %v412 = vsel %vm401, %v393, 0
      %v415 = vsel %vm401, %v394, 0
      %v418 = vsel %vm401, %v395, 0
      %v421 = vsel %vm401, %v396, 0
      %v424 = vsel %vm401, %v397, 0
      %v427 = vsel %vm401, %v398, 0
      %v430 = vsel %vm401, %v399, 0
      %v433 = vsel %vm401, %v400, 0
      %vm435 = vcmask 1043456
      %v437 = vsel %vm435, %v410, 0
      %439 = vmatprep.subr.mxu0 0.0
      %440 = vmatpush1.msra.mxu0 %v437
      %441 = vmatprep.subr.mxu0 0.0
      %442 = vmatpush1.msra.mxu0 0.0
      %443 = vmatprep.subr.mxu0 0.0
      %444 = vmatpush1.msra.mxu0 0.0
      %445 = vmatprep.subr.mxu0 0.0
      %446 = vmatpush1.msra.mxu0 0.0
      %447 = vmatprep.subr.mxu0 0.0
      %448 = vmatpush1.msra.mxu0 0.0
      %449 = vmatprep.subr.mxu0 0.0
      %450 = vmatpush1.msra.mxu0 0.0
      %451 = vmatprep.subr.mxu0 0.0
      %452 = vmatpush1.msra.mxu0 0.0
      %453 = vmatprep.subr.mxu0 0.0
      %454 = vmatpush1.msra.mxu0 0.0
      %455 = vmatprep.subr.mxu0 0.0
      %456 = vmatpush1.msra.mxu0 0.0
      %457 = vmatprep.subr.mxu0 0.0
      %458 = vmatpush1.msra.mxu0 0.0
      %459 = vmatprep.subr.mxu0 0.0
      %460 = vmatpush1.msra.mxu0 0.0
      %461 = vmatprep.subr.mxu0 0.0
      %462 = vmatpush1.msra.mxu0 0.0
      %463 = vmatprep.subr.mxu0 0.0
      %464 = vmatpush1.msra.mxu0 0.0
      %465 = vmatprep.subr.mxu0 0.0
      %466 = vmatpush1.msra.mxu0 0.0
      %467 = vmatprep.subr.mxu0 0.0
      %468 = vmatpush1.msra.mxu0 0.0
      %469 = vmatprep.subr.mxu0 0.0
      %470 = vmatpush1.msra.mxu0 0.0
      %471 = vmatprep.subr.mxu0 0.0
      %472 = vmatpush1.msra.mxu0 0.0
      %473 = vmatprep.subr.mxu0 0.0
      %474 = vmatpush1.msra.mxu0 0.0
      %475 = vmatprep.subr.mxu0 0.0
      %476 = vmatpush1.msra.mxu0 0.0
      %477 = vmatprep.subr.mxu0 0.0
      %478 = vmatpush1.msra.mxu0 0.0
      %479 = vmatprep.subr.mxu0 0.0
      %480 = vmatpush1.msra.mxu0 0.0
      %481 = vmatprep.subr.mxu0 0.0
      %482 = vmatpush1.msra.mxu0 0.0
      %483 = vmatprep.subr.mxu0 0.0
      %484 = vmatpush1.msra.mxu0 0.0
      %485 = vmatprep.subr.mxu0 0.0
      %486 = vmatpush1.msra.mxu0 0.0
      %487 = vmatprep.subr.mxu0 0.0
      %488 = vmatpush1.msra.mxu0 0.0
      %489 = vmatprep.subr.mxu0 0.0
      %490 = vmatpush1.msra.mxu0 0.0
      %491 = vmatprep.subr.mxu0 0.0
      %492 = vmatpush1.msra.mxu0 0.0
      %493 = vmatprep.subr.mxu0 0.0
      %494 = vmatpush1.msra.mxu0 0.0
      %495 = vmatprep.subr.mxu0 0.0
      %496 = vmatpush1.msra.mxu0 0.0
      %497 = vmatprep.subr.mxu0 0.0
      %498 = vmatpush1.msra.mxu0 0.0
      %499 = vmatprep.subr.mxu0 0.0
      %500 = vmatpush1.msra.mxu0 0.0
      %501 = vmatprep.subr.mxu0 0.0
      %502 = vmatpush1.msra.mxu0 0.0
      %503 = vmatprep.mubr.f32.mxu0 0.0
      %504 = vmatmul.mubr.f32.gmra.mrb[0].mxu0 %v412
      %v505 = vpop.f32.mrb[0].mxu0
      %v506 = vadd.f32 0.0, %v505
      %v507 = vpop.f32.mrb[0].mxu0
      %508 = vmatprep.mubr.f32.mxu0 0.0
      %509 = vmatmul.mubr.f32.gmra.mrb[0].mxu0 %v415
      %v510 = vpop.f32.mrb[0].mxu0
      %v511 = vadd.f32 0.0, %v510
      %v512 = vpop.f32.mrb[0].mxu0
      %513 = vmatprep.mubr.f32.mxu0 0.0
      %514 = vmatmul.mubr.f32.gmra.mrb[0].mxu0 %v418
      %v515 = vpop.f32.mrb[0].mxu0
      %v516 = vadd.f32 0.0, %v515
      %v517 = vpop.f32.mrb[0].mxu0
      %518 = vmatprep.mubr.f32.mxu0 0.0
      %519 = vmatmul.mubr.f32.gmra.mrb[0].mxu0 %v421
      %v520 = vpop.f32.mrb[0].mxu0
      %v521 = vadd.f32 0.0, %v520
      %v522 = vpop.f32.mrb[0].mxu0
      %523 = vmatprep.mubr.f32.mxu0 0.0
      %524 = vmatmul.mubr.f32.gmra.mrb[0].mxu0 %v424
      %v525 = vpop.f32.mrb[0].mxu0
      %v526 = vadd.f32 0.0, %v525
      %v527 = vpop.f32.mrb[0].mxu0
      %528 = vmatprep.mubr.f32.mxu0 0.0
      %529 = vmatmul.mubr.f32.gmra.mrb[0].mxu0 %v427
      %v530 = vpop.f32.mrb[0].mxu0
      %v531 = vadd.f32 0.0, %v530
      %v532 = vpop.f32.mrb[0].mxu0
      %533 = vmatprep.mubr.f32.mxu0 0.0
      %534 = vmatmul.mubr.f32.gmra.mrb[0].mxu0 %v430
      %v535 = vpop.f32.mrb[0].mxu0
      %v536 = vpop.f32.mrb[0].mxu0
      %537 = vmatprep.mubr.f32.mxu0 0.0
      %538 = vmatmul.mubr.f32.gmra.mrb[0].mxu0 %v433
      %v539 = vpop.f32.mrb[0].mxu0
      %v540 = vpop.f32.mrb[0].mxu0
      %541 = vdwg.mxu0
      %s542 = scalar_lea.vmem [#allocation2], 16
      %v543 = vld [vmem:[%s542 + $0x1] sm:$0xff]
      %v544 = vld [vmem:[%s542 + $0x9] sm:$0x7f]
      %v545 = vld [vmem:[%s542 + $0x11] sm:$0xff]
      %v546 = vld [vmem:[%s542 + $0x19] sm:$0x7f]
      %v547 = vld [vmem:[%s542 + $0x21] sm:$0xff]
      %v548 = vld [vmem:[%s542 + $0x29] sm:$0x7f]
      %v549 = vadd.f32 %v543, %v506
      %v550 = vadd.f32 %v544, %v511
      %v551 = vadd.f32 %v545, %v516
      %v552 = vadd.f32 %v546, %v521
      %v553 = vadd.f32 %v547, %v526
      %v554 = vadd.f32 %v548, %v531
      %555 = vst.msk [vmem:[%s542 + $0x1] sm:$0xff] %vm401, %v549
      %vm556 = vcmask 30720
      %557 = vst.msk [vmem:[%s542 + $0x9] sm:$0x7f] %vm556, %v550
      %558 = vst.msk [vmem:[%s542 + $0x11] sm:$0xff] %vm401, %v551
      %559 = vst.msk [vmem:[%s542 + $0x19] sm:$0x7f] %vm556, %v552
      %560 = vst.msk [vmem:[%s542 + $0x21] sm:$0xff] %vm401, %v553
      %561 = vst.msk [vmem:[%s542 + $0x29] sm:$0x7f] %vm556, %v554
      %s562 = scalar_lea.vmem %s3, 4
      %v563 = vld [vmem:[%s562] sm:$0xf]
      %v565 = vsel %vm435, %v563, 0
      %567 = vmatprep.subr.mxu0 0.0
      %568 = vmatpush1.msra.mxu0 %v565
      %569 = vmatprep.subr.mxu0 0.0
      %570 = vmatpush1.msra.mxu0 0.0
      %571 = vmatprep.subr.mxu0 0.0
      %572 = vmatpush1.msra.mxu0 0.0
      %573 = vmatprep.subr.mxu0 0.0
      %574 = vmatpush1.msra.mxu0 0.0
      %575 = vmatprep.subr.mxu0 0.0
      %576 = vmatpush1.msra.mxu0 0.0
      %577 = vmatprep.subr.mxu0 0.0
      %578 = vmatpush1.msra.mxu0 0.0
      %579 = vmatprep.subr.mxu0 0.0
      %580 = vmatpush1.msra.mxu0 0.0
      %581 = vmatprep.subr.mxu0 0.0
      %582 = vmatpush1.msra.mxu0 0.0
      %583 = vmatprep.subr.mxu0 0.0
      %584 = vmatpush1.msra.mxu0 0.0
      %585 = vmatprep.subr.mxu0 0.0
      %586 = vmatpush1.msra.mxu0 0.0
      %587 = vmatprep.subr.mxu0 0.0
      %588 = vmatpush1.msra.mxu0 0.0
      %589 = vmatprep.subr.mxu0 0.0
      %590 = vmatpush1.msra.mxu0 0.0
      %591 = vmatprep.subr.mxu0 0.0
      %592 = vmatpush1.msra.mxu0 0.0
      %593 = vmatprep.subr.mxu0 0.0
      %594 = vmatpush1.msra.mxu0 0.0
      %595 = vmatprep.subr.mxu0 0.0
      %596 = vmatpush1.msra.mxu0 0.0
      %597 = vmatprep.subr.mxu0 0.0
      %598 = vmatpush1.msra.mxu0 0.0
      %599 = vmatprep.subr.mxu0 0.0
      %600 = vmatpush1.msra.mxu0 0.0
      %601 = vmatprep.subr.mxu0 0.0
      %602 = vmatpush1.msra.mxu0 0.0
      %603 = vmatprep.subr.mxu0 0.0
      %604 = vmatpush1.msra.mxu0 0.0
      %605 = vmatprep.subr.mxu0 0.0
      %606 = vmatpush1.msra.mxu0 0.0
      %607 = vmatprep.subr.mxu0 0.0
      %608 = vmatpush1.msra.mxu0 0.0
      %609 = vmatprep.subr.mxu0 0.0
      %610 = vmatpush1.msra.mxu0 0.0
      %611 = vmatprep.subr.mxu0 0.0
      %612 = vmatpush1.msra.mxu0 0.0
      %613 = vmatprep.subr.mxu0 0.0
      %614 = vmatpush1.msra.mxu0 0.0
      %615 = vmatprep.subr.mxu0 0.0
      %616 = vmatpush1.msra.mxu0 0.0
      %617 = vmatprep.subr.mxu0 0.0
      %618 = vmatpush1.msra.mxu0 0.0
      %619 = vmatprep.subr.mxu0 0.0
      %620 = vmatpush1.msra.mxu0 0.0
      %621 = vmatprep.subr.mxu0 0.0
      %622 = vmatpush1.msra.mxu0 0.0
      %623 = vmatprep.subr.mxu0 0.0
      %624 = vmatpush1.msra.mxu0 0.0
      %625 = vmatprep.subr.mxu0 0.0
      %626 = vmatpush1.msra.mxu0 0.0
      %627 = vmatprep.subr.mxu0 0.0
      %628 = vmatpush1.msra.mxu0 0.0
      %629 = vmatprep.subr.mxu0 0.0
      %630 = vmatpush1.msra.mxu0 0.0
      %631 = vmatprep.mubr.f32.mxu0 0.0
      %632 = vmatmul.mubr.f32.gmra.mrb[0].mxu0 %v412
      %v633 = vpop.f32.mrb[0].mxu0
      %v634 = vadd.f32 0.0, %v633
      %v635 = vpop.f32.mrb[0].mxu0
      %636 = vmatprep.mubr.f32.mxu0 0.0
      %637 = vmatmul.mubr.f32.gmra.mrb[0].mxu0 %v415
      %v638 = vpop.f32.mrb[0].mxu0
      %v639 = vadd.f32 0.0, %v638
      %v640 = vpop.f32.mrb[0].mxu0
      %641 = vmatprep.mubr.f32.mxu0 0.0
      %642 = vmatmul.mubr.f32.gmra.mrb[0].mxu0 %v418
      %v643 = vpop.f32.mrb[0].mxu0
      %v644 = vadd.f32 0.0, %v643
      %v645 = vpop.f32.mrb[0].mxu0
      %646 = vmatprep.mubr.f32.mxu0 0.0
      %647 = vmatmul.mubr.f32.gmra.mrb[0].mxu0 %v421
      %v648 = vpop.f32.mrb[0].mxu0
      %v649 = vadd.f32 0.0, %v648
      %v650 = vpop.f32.mrb[0].mxu0
      %651 = vmatprep.mubr.f32.mxu0 0.0
      %652 = vmatmul.mubr.f32.gmra.mrb[0].mxu0 %v424
      %v653 = vpop.f32.mrb[0].mxu0
      %v654 = vadd.f32 0.0, %v653
      %v655 = vpop.f32.mrb[0].mxu0
      %656 = vmatprep.mubr.f32.mxu0 0.0
      %657 = vmatmul.mubr.f32.gmra.mrb[0].mxu0 %v427
      %v658 = vpop.f32.mrb[0].mxu0
      %v659 = vadd.f32 0.0, %v658
      %v660 = vpop.f32.mrb[0].mxu0
      %661 = vmatprep.mubr.f32.mxu0 0.0
      %662 = vmatmul.mubr.f32.gmra.mrb[0].mxu0 %v430
      %v663 = vpop.f32.mrb[0].mxu0
      %v664 = vpop.f32.mrb[0].mxu0
      %665 = vmatprep.mubr.f32.mxu0 0.0
      %666 = vmatmul.mubr.f32.gmra.mrb[0].mxu0 %v433
      %v667 = vpop.f32.mrb[0].mxu0
      %v668 = vpop.f32.mrb[0].mxu0
      %669 = vdwg.mxu0
      %v670 = vld [vmem:[%s542] sm:$0xff]
      %v671 = vld [vmem:[%s542 + $0x8] sm:$0xff]
      %v672 = vld [vmem:[%s542 + $0x10] sm:$0xff]
      %v673 = vld [vmem:[%s542 + $0x18] sm:$0xff]
      %v674 = vld [vmem:[%s542 + $0x20] sm:$0xff]
      %v675 = vld [vmem:[%s542 + $0x28] sm:$0xff]
      %v676 = vadd.f32 %v670, %v634
      %v677 = vadd.f32 %v671, %v639
      %v678 = vadd.f32 %v672, %v644
      %v679 = vadd.f32 %v673, %v649
      %v680 = vadd.f32 %v674, %v654
      %v681 = vadd.f32 %v675, %v659
      %682 = vst.msk [vmem:[%s542] sm:$0xff] %vm401, %v676
      %683 = vst.msk [vmem:[%s542 + $0x8] sm:$0xff] %vm401, %v677
      %684 = vst.msk [vmem:[%s542 + $0x10] sm:$0xff] %vm401, %v678
      %685 = vst.msk [vmem:[%s542 + $0x18] sm:$0xff] %vm401, %v679
      %686 = vst.msk [vmem:[%s542 + $0x20] sm:$0xff] %vm401, %v680
      %687 = vst.msk [vmem:[%s542 + $0x28] sm:$0xff] %vm401, %v681
      %s688 = scalar_lea.vmem %s3, 8
      %v689 = vld [vmem:[%s688] sm:$0xf]
      %v691 = vsel %vm435, %v689, 0
      %693 = vmatprep.subr.mxu0 0.0
      %694 = vmatpush1.msra.mxu0 %v691
      %695 = vmatprep.subr.mxu0 0.0
      %696 = vmatpush1.msra.mxu0 0.0
      %697 = vmatprep.subr.mxu0 0.0
      %698 = vmatpush1.msra.mxu0 0.0
      %699 = vmatprep.subr.mxu0 0.0
      %700 = vmatpush1.msra.mxu0 0.0
      %701 = vmatprep.subr.mxu0 0.0
      %702 = vmatpush1.msra.mxu0 0.0
      %703 = vmatprep.subr.mxu0 0.0
      %704 = vmatpush1.msra.mxu0 0.0
      %705 = vmatprep.subr.mxu0 0.0
      %706 = vmatpush1.msra.mxu0 0.0
      %707 = vmatprep.subr.mxu0 0.0
      %708 = vmatpush1.msra.mxu0 0.0
      %709 = vmatprep.subr.mxu0 0.0
      %710 = vmatpush1.msra.mxu0 0.0
      %711 = vmatprep.subr.mxu0 0.0
      %712 = vmatpush1.msra.mxu0 0.0
      %713 = vmatprep.subr.mxu0 0.0
      %714 = vmatpush1.msra.mxu0 0.0
      %715 = vmatprep.subr.mxu0 0.0
      %716 = vmatpush1.msra.mxu0 0.0
      %717 = vmatprep.subr.mxu0 0.0
      %718 = vmatpush1.msra.mxu0 0.0
      %719 = vmatprep.subr.mxu0 0.0
      %720 = vmatpush1.msra.mxu0 0.0
      %721 = vmatprep.subr.mxu0 0.0
      %722 = vmatpush1.msra.mxu0 0.0
      %723 = vmatprep.subr.mxu0 0.0
      %724 = vmatpush1.msra.mxu0 0.0
      %725 = vmatprep.subr.mxu0 0.0
      %726 = vmatpush1.msra.mxu0 0.0
      %727 = vmatprep.subr.mxu0 0.0
      %728 = vmatpush1.msra.mxu0 0.0
      %729 = vmatprep.subr.mxu0 0.0
      %730 = vmatpush1.msra.mxu0 0.0
      %731 = vmatprep.subr.mxu0 0.0
      %732 = vmatpush1.msra.mxu0 0.0
      %733 = vmatprep.subr.mxu0 0.0
      %734 = vmatpush1.msra.mxu0 0.0
      %735 = vmatprep.subr.mxu0 0.0
      %736 = vmatpush1.msra.mxu0 0.0
      %737 = vmatprep.subr.mxu0 0.0
      %738 = vmatpush1.msra.mxu0 0.0
      %739 = vmatprep.subr.mxu0 0.0
      %740 = vmatpush1.msra.mxu0 0.0
      %741 = vmatprep.subr.mxu0 0.0
      %742 = vmatpush1.msra.mxu0 0.0
      %743 = vmatprep.subr.mxu0 0.0
      %744 = vmatpush1.msra.mxu0 0.0
      %745 = vmatprep.subr.mxu0 0.0
      %746 = vmatpush1.msra.mxu0 0.0
      %747 = vmatprep.subr.mxu0 0.0
      %748 = vmatpush1.msra.mxu0 0.0
      %749 = vmatprep.subr.mxu0 0.0
      %750 = vmatpush1.msra.mxu0 0.0
      %751 = vmatprep.subr.mxu0 0.0
      %752 = vmatpush1.msra.mxu0 0.0
      %753 = vmatprep.subr.mxu0 0.0
      %754 = vmatpush1.msra.mxu0 0.0
      %755 = vmatprep.subr.mxu0 0.0
      %756 = vmatpush1.msra.mxu0 0.0
      %757 = vmatprep.mubr.f32.mxu0 0.0
      %758 = vmatmul.mubr.f32.gmra.mrb[0].mxu0 %v412
      %v759 = vpop.f32.mrb[0].mxu0
      %v760 = vadd.f32 0.0, %v759
      %v761 = vpop.f32.mrb[0].mxu0
      %762 = vmatprep.mubr.f32.mxu0 0.0
      %763 = vmatmul.mubr.f32.gmra.mrb[0].mxu0 %v415
      %v764 = vpop.f32.mrb[0].mxu0
      %v765 = vadd.f32 0.0, %v764
      %v766 = vpop.f32.mrb[0].mxu0
      %767 = vmatprep.mubr.f32.mxu0 0.0
      %768 = vmatmul.mubr.f32.gmra.mrb[0].mxu0 %v418
      %v769 = vpop.f32.mrb[0].mxu0
      %v770 = vadd.f32 0.0, %v769
      %v771 = vpop.f32.mrb[0].mxu0
      %772 = vmatprep.mubr.f32.mxu0 0.0
      %773 = vmatmul.mubr.f32.gmra.mrb[0].mxu0 %v421
      %v774 = vpop.f32.mrb[0].mxu0
      %v775 = vadd.f32 0.0, %v774
      %v776 = vpop.f32.mrb[0].mxu0
      %777 = vmatprep.mubr.f32.mxu0 0.0
      %778 = vmatmul.mubr.f32.gmra.mrb[0].mxu0 %v424
      %v779 = vpop.f32.mrb[0].mxu0
      %v780 = vadd.f32 0.0, %v779
      %v781 = vpop.f32.mrb[0].mxu0
      %782 = vmatprep.mubr.f32.mxu0 0.0
      %783 = vmatmul.mubr.f32.gmra.mrb[0].mxu0 %v427
      %v784 = vpop.f32.mrb[0].mxu0
      %v785 = vadd.f32 0.0, %v784
      %v786 = vpop.f32.mrb[0].mxu0
      %787 = vmatprep.mubr.f32.mxu0 0.0
      %788 = vmatmul.mubr.f32.gmra.mrb[0].mxu0 %v430
      %v789 = vpop.f32.mrb[0].mxu0
      %v790 = vpop.f32.mrb[0].mxu0
      %791 = vmatprep.mubr.f32.mxu0 0.0
      %792 = vmatmul.mubr.f32.gmra.mrb[0].mxu0 %v433
      %v793 = vpop.f32.mrb[0].mxu0
      %v794 = vpop.f32.mrb[0].mxu0
      %795 = vdwg.mxu0
      %v796 = vld [vmem:[%s542] sm:$0xff]
      %v797 = vld [vmem:[%s542 + $0x8] sm:$0x7f]
      %v798 = vld [vmem:[%s542 + $0x10] sm:$0xff]
      %v799 = vld [vmem:[%s542 + $0x18] sm:$0x7f]
      %v800 = vld [vmem:[%s542 + $0x20] sm:$0xff]
      %v801 = vld [vmem:[%s542 + $0x28] sm:$0x7f]
      %vm808 = vcmask 1046528
      %v809 = vrot.slane %v760, 1
      %v810 = vrot.slane %v765, 1
      %v811 = vsel %vm808, %v809, %v810
      %v812 = vrot.slane %v770, 1
      %v813 = vrot.slane %v775, 1
      %v814 = vsel %vm808, %v812, %v813
      %v815 = vrot.slane %v780, 1
      %v816 = vrot.slane %v785, 1
      %v817 = vsel %vm808, %v815, %v816
      %v824 = vadd.f32 %v796, %v811
      %v825 = vadd.f32 %v797, %v810
      %v826 = vadd.f32 %v798, %v814
      %v827 = vadd.f32 %v799, %v813
      %v828 = vadd.f32 %v800, %v817
      %v829 = vadd.f32 %v801, %v816
      %830 = vst.msk [vmem:[%s542] sm:$0xff] %vm401, %v824
      %831 = vst.msk [vmem:[%s542 + $0x8] sm:$0x7f] %vm556, %v825
      %832 = vst.msk [vmem:[%s542 + $0x10] sm:$0xff] %vm401, %v826
      %833 = vst.msk [vmem:[%s542 + $0x18] sm:$0x7f] %vm556, %v827
      %834 = vst.msk [vmem:[%s542 + $0x20] sm:$0xff] %vm401, %v828
      %835 = vst.msk [vmem:[%s542 + $0x28] sm:$0x7f] %vm556, %v829
      %s836 = scalar_lea.vmem %s3, 12
      %v837 = vld [vmem:[%s836] sm:$0xf]
      %v839 = vsel %vm435, %v837, 0
      %841 = vmatprep.subr.mxu0 0.0
      %842 = vmatpush1.msra.mxu0 %v839
      %843 = vmatprep.subr.mxu0 0.0
      %844 = vmatpush1.msra.mxu0 0.0
      %845 = vmatprep.subr.mxu0 0.0
      %846 = vmatpush1.msra.mxu0 0.0
      %847 = vmatprep.subr.mxu0 0.0
      %848 = vmatpush1.msra.mxu0 0.0
      %849 = vmatprep.subr.mxu0 0.0
      %850 = vmatpush1.msra.mxu0 0.0
      %851 = vmatprep.subr.mxu0 0.0
      %852 = vmatpush1.msra.mxu0 0.0
      %853 = vmatprep.subr.mxu0 0.0
      %854 = vmatpush1.msra.mxu0 0.0
      %855 = vmatprep.subr.mxu0 0.0
      %856 = vmatpush1.msra.mxu0 0.0
      %857 = vmatprep.subr.mxu0 0.0
      %858 = vmatpush1.msra.mxu0 0.0
      %859 = vmatprep.subr.mxu0 0.0
      %860 = vmatpush1.msra.mxu0 0.0
      %861 = vmatprep.subr.mxu0 0.0
      %862 = vmatpush1.msra.mxu0 0.0
      %863 = vmatprep.subr.mxu0 0.0
      %864 = vmatpush1.msra.mxu0 0.0
      %865 = vmatprep.subr.mxu0 0.0
      %866 = vmatpush1.msra.mxu0 0.0
      %867 = vmatprep.subr.mxu0 0.0
      %868 = vmatpush1.msra.mxu0 0.0
      %869 = vmatprep.subr.mxu0 0.0
      %870 = vmatpush1.msra.mxu0 0.0
      %871 = vmatprep.subr.mxu0 0.0
      %872 = vmatpush1.msra.mxu0 0.0
      %873 = vmatprep.subr.mxu0 0.0
      %874 = vmatpush1.msra.mxu0 0.0
      %875 = vmatprep.subr.mxu0 0.0
      %876 = vmatpush1.msra.mxu0 0.0
      %877 = vmatprep.subr.mxu0 0.0
      %878 = vmatpush1.msra.mxu0 0.0
      %879 = vmatprep.subr.mxu0 0.0
      %880 = vmatpush1.msra.mxu0 0.0
      %881 = vmatprep.subr.mxu0 0.0
      %882 = vmatpush1.msra.mxu0 0.0
      %883 = vmatprep.subr.mxu0 0.0
      %884 = vmatpush1.msra.mxu0 0.0
      %885 = vmatprep.subr.mxu0 0.0
      %886 = vmatpush1.msra.mxu0 0.0
      %887 = vmatprep.subr.mxu0 0.0
      %888 = vmatpush1.msra.mxu0 0.0
      %889 = vmatprep.subr.mxu0 0.0
      %890 = vmatpush1.msra.mxu0 0.0
      %891 = vmatprep.subr.mxu0 0.0
      %892 = vmatpush1.msra.mxu0 0.0
      %893 = vmatprep.subr.mxu0 0.0
      %894 = vmatpush1.msra.mxu0 0.0
      %895 = vmatprep.subr.mxu0 0.0
      %896 = vmatpush1.msra.mxu0 0.0
      %897 = vmatprep.subr.mxu0 0.0
      %898 = vmatpush1.msra.mxu0 0.0
      %899 = vmatprep.subr.mxu0 0.0
      %900 = vmatpush1.msra.mxu0 0.0
      %901 = vmatprep.subr.mxu0 0.0
      %902 = vmatpush1.msra.mxu0 0.0
      %903 = vmatprep.subr.mxu0 0.0
      %904 = vmatpush1.msra.mxu0 0.0
      %905 = vmatprep.mubr.f32.mxu0 0.0
      %906 = vmatmul.mubr.f32.gmra.mrb[0].mxu0 %v412
      %v907 = vpop.f32.mrb[0].mxu0
      %v908 = vadd.f32 0.0, %v907
      %v909 = vpop.f32.mrb[0].mxu0
      %910 = vmatprep.mubr.f32.mxu0 0.0
      %911 = vmatmul.mubr.f32.gmra.mrb[0].mxu0 %v415
      %v912 = vpop.f32.mrb[0].mxu0
      %v913 = vadd.f32 0.0, %v912
      %v914 = vpop.f32.mrb[0].mxu0
      %915 = vmatprep.mubr.f32.mxu0 0.0
      %916 = vmatmul.mubr.f32.gmra.mrb[0].mxu0 %v418
      %v917 = vpop.f32.mrb[0].mxu0
      %v918 = vadd.f32 0.0, %v917
      %v919 = vpop.f32.mrb[0].mxu0
      %920 = vmatprep.mubr.f32.mxu0 0.0
      %921 = vmatmul.mubr.f32.gmra.mrb[0].mxu0 %v421
      %v922 = vpop.f32.mrb[0].mxu0
      %v923 = vadd.f32 0.0, %v922
      %v924 = vpop.f32.mrb[0].mxu0
      %925 = vmatprep.mubr.f32.mxu0 0.0
      %926 = vmatmul.mubr.f32.gmra.mrb[0].mxu0 %v424
      %v927 = vpop.f32.mrb[0].mxu0
      %v928 = vadd.f32 0.0, %v927
      %v929 = vpop.f32.mrb[0].mxu0
      %930 = vmatprep.mubr.f32.mxu0 0.0
      %931 = vmatmul.mubr.f32.gmra.mrb[0].mxu0 %v427
      %v932 = vpop.f32.mrb[0].mxu0
      %v933 = vadd.f32 0.0, %v932
      %v934 = vpop.f32.mrb[0].mxu0
      %935 = vmatprep.mubr.f32.mxu0 0.0
      %936 = vmatmul.mubr.f32.gmra.mrb[0].mxu0 %v430
      %v937 = vpop.f32.mrb[0].mxu0
      %v938 = vadd.f32 0.0, %v937
      %v939 = vpop.f32.mrb[0].mxu0
      %940 = vmatprep.mubr.f32.mxu0 0.0
      %941 = vmatmul.mubr.f32.gmra.mrb[0].mxu0 %v433
      %v942 = vpop.f32.mrb[0].mxu0
      %v943 = vadd.f32 0.0, %v942
      %v944 = vpop.f32.mrb[0].mxu0
      %945 = vdwg.mxu0
      %v946 = vld [vmem:[#allocation2 + $0x1] sm:$0xff]
      %v947 = vld [vmem:[#allocation2 + $0x9] sm:$0x7f]
      %v948 = vld [vmem:[#allocation2 + $0x11] sm:$0xff]
      %v949 = vld [vmem:[#allocation2 + $0x19] sm:$0x7f]
      %v950 = vld [vmem:[#allocation2 + $0x21] sm:$0xff]
      %v951 = vld [vmem:[#allocation2 + $0x29] sm:$0x7f]
      %v952 = vld [vmem:[#allocation2 + $0x31] sm:$0xff]
      %v953 = vld [vmem:[#allocation2 + $0x39] sm:$0x7f]
      %v954 = vadd.f32 %v946, %v908
      %v955 = vadd.f32 %v947, %v913
      %v956 = vadd.f32 %v948, %v918
      %v957 = vadd.f32 %v949, %v923
      %v958 = vadd.f32 %v950, %v928
      %v959 = vadd.f32 %v951, %v933
      %v960 = vadd.f32 %v952, %v938
      %v961 = vadd.f32 %v953, %v943
      %962 = vst.msk [vmem:[#allocation2 + $0x1] sm:$0xff] %vm401, %v954
      %963 = vst.msk [vmem:[#allocation2 + $0x9] sm:$0x7f] %vm556, %v955
      %964 = vst.msk [vmem:[#allocation2 + $0x11] sm:$0xff] %vm401, %v956
      %965 = vst.msk [vmem:[#allocation2 + $0x19] sm:$0x7f] %vm556, %v957
      %966 = vst.msk [vmem:[#allocation2 + $0x21] sm:$0xff] %vm401, %v958
      %967 = vst.msk [vmem:[#allocation2 + $0x29] sm:$0x7f] %vm556, %v959
      %968 = vst.msk [vmem:[#allocation2 + $0x31] sm:$0xff] %vm401, %v960
      %969 = vst.msk [vmem:[#allocation2 + $0x39] sm:$0x7f] %vm556, %v961
      %s970 = scalar_lea.vmem %s3, 16
      %v971 = vld [vmem:[%s970] sm:$0xf]
      %v973 = vsel %vm435, %v971, 0
      %975 = vmatprep.subr.mxu0 0.0
      %976 = vmatpush1.msra.mxu0 %v973
      %977 = vmatprep.subr.mxu0 0.0
      %978 = vmatpush1.msra.mxu0 0.0
      %979 = vmatprep.subr.mxu0 0.0
      %980 = vmatpush1.msra.mxu0 0.0
      %981 = vmatprep.subr.mxu0 0.0
      %982 = vmatpush1.msra.mxu0 0.0
      %983 = vmatprep.subr.mxu0 0.0
      %984 = vmatpush1.msra.mxu0 0.0
      %985 = vmatprep.subr.mxu0 0.0
      %986 = vmatpush1.msra.mxu0 0.0
      %987 = vmatprep.subr.mxu0 0.0
      %988 = vmatpush1.msra.mxu0 0.0
      %989 = vmatprep.subr.mxu0 0.0
      %990 = vmatpush1.msra.mxu0 0.0
      %991 = vmatprep.subr.mxu0 0.0
      %992 = vmatpush1.msra.mxu0 0.0
      %993 = vmatprep.subr.mxu0 0.0
      %994 = vmatpush1.msra.mxu0 0.0
      %995 = vmatprep.subr.mxu0 0.0
      %996 = vmatpush1.msra.mxu0 0.0
      %997 = vmatprep.subr.mxu0 0.0
      %998 = vmatpush1.msra.mxu0 0.0
      %999 = vmatprep.subr.mxu0 0.0
      %1000 = vmatpush1.msra.mxu0 0.0
      %1001 = vmatprep.subr.mxu0 0.0
      %1002 = vmatpush1.msra.mxu0 0.0
      %1003 = vmatprep.subr.mxu0 0.0
      %1004 = vmatpush1.msra.mxu0 0.0
      %1005 = vmatprep.subr.mxu0 0.0
      %1006 = vmatpush1.msra.mxu0 0.0
      %1007 = vmatprep.subr.mxu0 0.0
      %1008 = vmatpush1.msra.mxu0 0.0
      %1009 = vmatprep.subr.mxu0 0.0
      %1010 = vmatpush1.msra.mxu0 0.0
      %1011 = vmatprep.subr.mxu0 0.0
      %1012 = vmatpush1.msra.mxu0 0.0
      %1013 = vmatprep.subr.mxu0 0.0
      %1014 = vmatpush1.msra.mxu0 0.0
      %1015 = vmatprep.subr.mxu0 0.0
      %1016 = vmatpush1.msra.mxu0 0.0
      %1017 = vmatprep.subr.mxu0 0.0
      %1018 = vmatpush1.msra.mxu0 0.0
      %1019 = vmatprep.subr.mxu0 0.0
      %1020 = vmatpush1.msra.mxu0 0.0
      %1021 = vmatprep.subr.mxu0 0.0
      %1022 = vmatpush1.msra.mxu0 0.0
      %1023 = vmatprep.subr.mxu0 0.0
      %1024 = vmatpush1.msra.mxu0 0.0
      %1025 = vmatprep.subr.mxu0 0.0
      %1026 = vmatpush1.msra.mxu0 0.0
      %1027 = vmatprep.subr.mxu0 0.0
      %1028 = vmatpush1.msra.mxu0 0.0
      %1029 = vmatprep.subr.mxu0 0.0
      %1030 = vmatpush1.msra.mxu0 0.0
      %1031 = vmatprep.subr.mxu0 0.0
      %1032 = vmatpush1.msra.mxu0 0.0
      %1033 = vmatprep.subr.mxu0 0.0
      %1034 = vmatpush1.msra.mxu0 0.0
      %1035 = vmatprep.subr.mxu0 0.0
      %1036 = vmatpush1.msra.mxu0 0.0
      %1037 = vmatprep.subr.mxu0 0.0
      %1038 = vmatpush1.msra.mxu0 0.0
      %1039 = vmatprep.mubr.f32.mxu0 0.0
      %1040 = vmatmul.mubr.f32.gmra.mrb[0].mxu0 %v412
      %v1041 = vpop.f32.mrb[0].mxu0
      %v1042 = vadd.f32 0.0, %v1041
      %v1043 = vpop.f32.mrb[0].mxu0
      %1044 = vmatprep.mubr.f32.mxu0 0.0
      %1045 = vmatmul.mubr.f32.gmra.mrb[0].mxu0 %v415
      %v1046 = vpop.f32.mrb[0].mxu0
      %v1047 = vadd.f32 0.0, %v1046
      %v1048 = vpop.f32.mrb[0].mxu0
      %1049 = vmatprep.mubr.f32.mxu0 0.0
      %1050 = vmatmul.mubr.f32.gmra.mrb[0].mxu0 %v418
      %v1051 = vpop.f32.mrb[0].mxu0
      %v1052 = vadd.f32 0.0, %v1051
      %v1053 = vpop.f32.mrb[0].mxu0
      %1054 = vmatprep.mubr.f32.mxu0 0.0
      %1055 = vmatmul.mubr.f32.gmra.mrb[0].mxu0 %v421
      %v1056 = vpop.f32.mrb[0].mxu0
      %v1057 = vadd.f32 0.0, %v1056
      %v1058 = vpop.f32.mrb[0].mxu0
      %1059 = vmatprep.mubr.f32.mxu0 0.0
      %1060 = vmatmul.mubr.f32.gmra.mrb[0].mxu0 %v424
      %v1061 = vpop.f32.mrb[0].mxu0
      %v1062 = vadd.f32 0.0, %v1061
      %v1063 = vpop.f32.mrb[0].mxu0
      %1064 = vmatprep.mubr.f32.mxu0 0.0
      %1065 = vmatmul.mubr.f32.gmra.mrb[0].mxu0 %v427
      %v1066 = vpop.f32.mrb[0].mxu0
      %v1067 = vadd.f32 0.0, %v1066
      %v1068 = vpop.f32.mrb[0].mxu0
      %1069 = vmatprep.mubr.f32.mxu0 0.0
      %1070 = vmatmul.mubr.f32.gmra.mrb[0].mxu0 %v430
      %v1071 = vpop.f32.mrb[0].mxu0
      %v1072 = vadd.f32 0.0, %v1071
      %v1073 = vpop.f32.mrb[0].mxu0
      %1074 = vmatprep.mubr.f32.mxu0 0.0
      %1075 = vmatmul.mubr.f32.gmra.mrb[0].mxu0 %v433
      %v1076 = vpop.f32.mrb[0].mxu0
      %v1077 = vadd.f32 0.0, %v1076
      %v1078 = vpop.f32.mrb[0].mxu0
      %1079 = vdwg.mxu0
      %v1080 = vld [vmem:[#allocation2] sm:$0xff]
      %v1081 = vld [vmem:[#allocation2 + $0x8] sm:$0xff]
      %v1082 = vld [vmem:[#allocation2 + $0x10] sm:$0xff]
      %v1083 = vld [vmem:[#allocation2 + $0x18] sm:$0xff]
      %v1084 = vld [vmem:[#allocation2 + $0x20] sm:$0xff]
      %v1085 = vld [vmem:[#allocation2 + $0x28] sm:$0xff]
      %v1086 = vld [vmem:[#allocation2 + $0x30] sm:$0xff]
      %v1087 = vld [vmem:[#allocation2 + $0x38] sm:$0xff]
      %v1088 = vadd.f32 %v1080, %v1042
      %v1089 = vadd.f32 %v1081, %v1047
      %v1090 = vadd.f32 %v1082, %v1052
      %v1091 = vadd.f32 %v1083, %v1057
      %v1092 = vadd.f32 %v1084, %v1062
      %v1093 = vadd.f32 %v1085, %v1067
      %v1094 = vadd.f32 %v1086, %v1072
      %v1095 = vadd.f32 %v1087, %v1077
      %1096 = vst.msk [vmem:[#allocation2] sm:$0xff] %vm401, %v1088
      %1097 = vst.msk [vmem:[#allocation2 + $0x8] sm:$0xff] %vm401, %v1089
      %1098 = vst.msk [vmem:[#allocation2 + $0x10] sm:$0xff] %vm401, %v1090
      %1099 = vst.msk [vmem:[#allocation2 + $0x18] sm:$0xff] %vm401, %v1091
      %1100 = vst.msk [vmem:[#allocation2 + $0x20] sm:$0xff] %vm401, %v1092
      %1101 = vst.msk [vmem:[#allocation2 + $0x28] sm:$0xff] %vm401, %v1093
      %1102 = vst.msk [vmem:[#allocation2 + $0x30] sm:$0xff] %vm401, %v1094
      %1103 = vst.msk [vmem:[#allocation2 + $0x38] sm:$0xff] %vm401, %v1095
      %s1104 = scalar_lea.vmem %s3, 20
      %v1105 = vld [vmem:[%s1104] sm:$0xf]
      %v1107 = vsel %vm435, %v1105, 0
      %1109 = vmatprep.subr.mxu0 0.0
      %1110 = vmatpush1.msra.mxu0 %v1107
      %1111 = vmatprep.subr.mxu0 0.0
      %1112 = vmatpush1.msra.mxu0 0.0
      %1113 = vmatprep.subr.mxu0 0.0
      %1114 = vmatpush1.msra.mxu0 0.0
      %1115 = vmatprep.subr.mxu0 0.0
      %1116 = vmatpush1.msra.mxu0 0.0
      %1117 = vmatprep.subr.mxu0 0.0
      %1118 = vmatpush1.msra.mxu0 0.0
      %1119 = vmatprep.subr.mxu0 0.0
      %1120 = vmatpush1.msra.mxu0 0.0
      %1121 = vmatprep.subr.mxu0 0.0
      %1122 = vmatpush1.msra.mxu0 0.0
      %1123 = vmatprep.subr.mxu0 0.0
      %1124 = vmatpush1.msra.mxu0 0.0
      %1125 = vmatprep.subr.mxu0 0.0
      %1126 = vmatpush1.msra.mxu0 0.0
      %1127 = vmatprep.subr.mxu0 0.0
      %1128 = vmatpush1.msra.mxu0 0.0
      %1129 = vmatprep.subr.mxu0 0.0
      %1130 = vmatpush1.msra.mxu0 0.0
      %1131 = vmatprep.subr.mxu0 0.0
      %1132 = vmatpush1.msra.mxu0 0.0
      %1133 = vmatprep.subr.mxu0 0.0
      %1134 = vmatpush1.msra.mxu0 0.0
      %1135 = vmatprep.subr.mxu0 0.0
      %1136 = vmatpush1.msra.mxu0 0.0
      %1137 = vmatprep.subr.mxu0 0.0
      %1138 = vmatpush1.msra.mxu0 0.0
      %1139 = vmatprep.subr.mxu0 0.0
      %1140 = vmatpush1.msra.mxu0 0.0
      %1141 = vmatprep.subr.mxu0 0.0
      %1142 = vmatpush1.msra.mxu0 0.0
      %1143 = vmatprep.subr.mxu0 0.0
      %1144 = vmatpush1.msra.mxu0 0.0
      %1145 = vmatprep.subr.mxu0 0.0
      %1146 = vmatpush1.msra.mxu0 0.0
      %1147 = vmatprep.subr.mxu0 0.0
      %1148 = vmatpush1.msra.mxu0 0.0
      %1149 = vmatprep.subr.mxu0 0.0
      %1150 = vmatpush1.msra.mxu0 0.0
      %1151 = vmatprep.subr.mxu0 0.0
      %1152 = vmatpush1.msra.mxu0 0.0
      %1153 = vmatprep.subr.mxu0 0.0
      %1154 = vmatpush1.msra.mxu0 0.0
      %1155 = vmatprep.subr.mxu0 0.0
      %1156 = vmatpush1.msra.mxu0 0.0
      %1157 = vmatprep.subr.mxu0 0.0
      %1158 = vmatpush1.msra.mxu0 0.0
      %1159 = vmatprep.subr.mxu0 0.0
      %1160 = vmatpush1.msra.mxu0 0.0
      %1161 = vmatprep.subr.mxu0 0.0
      %1162 = vmatpush1.msra.mxu0 0.0
      %1163 = vmatprep.subr.mxu0 0.0
      %1164 = vmatpush1.msra.mxu0 0.0
      %1165 = vmatprep.subr.mxu0 0.0
      %1166 = vmatpush1.msra.mxu0 0.0
      %1167 = vmatprep.subr.mxu0 0.0
      %1168 = vmatpush1.msra.mxu0 0.0
      %1169 = vmatprep.subr.mxu0 0.0
      %1170 = vmatpush1.msra.mxu0 0.0
      %1171 = vmatprep.subr.mxu0 0.0
      %1172 = vmatpush1.msra.mxu0 0.0
      %1173 = vmatprep.mubr.f32.mxu0 0.0
      %1174 = vmatmul.mubr.f32.gmra.mrb[0].mxu0 %v412
      %v1175 = vpop.f32.mrb[0].mxu0
      %v1176 = vadd.f32 0.0, %v1175
      %v1177 = vpop.f32.mrb[0].mxu0
      %1178 = vmatprep.mubr.f32.mxu0 0.0
      %1179 = vmatmul.mubr.f32.gmra.mrb[0].mxu0 %v415
      %v1180 = vpop.f32.mrb[0].mxu0
      %v1181 = vadd.f32 0.0, %v1180
      %v1182 = vpop.f32.mrb[0].mxu0
      %1183 = vmatprep.mubr.f32.mxu0 0.0
      %1184 = vmatmul.mubr.f32.gmra.mrb[0].mxu0 %v418
      %v1185 = vpop.f32.mrb[0].mxu0
      %v1186 = vadd.f32 0.0, %v1185
      %v1187 = vpop.f32.mrb[0].mxu0
      %1188 = vmatprep.mubr.f32.mxu0 0.0
      %1189 = vmatmul.mubr.f32.gmra.mrb[0].mxu0 %v421
      %v1190 = vpop.f32.mrb[0].mxu0
      %v1191 = vadd.f32 0.0, %v1190
      %v1192 = vpop.f32.mrb[0].mxu0
      %1193 = vmatprep.mubr.f32.mxu0 0.0
      %1194 = vmatmul.mubr.f32.gmra.mrb[0].mxu0 %v424
      %v1195 = vpop.f32.mrb[0].mxu0
      %v1196 = vadd.f32 0.0, %v1195
      %v1197 = vpop.f32.mrb[0].mxu0
      %1198 = vmatprep.mubr.f32.mxu0 0.0
      %1199 = vmatmul.mubr.f32.gmra.mrb[0].mxu0 %v427
      %v1200 = vpop.f32.mrb[0].mxu0
      %v1201 = vadd.f32 0.0, %v1200
      %v1202 = vpop.f32.mrb[0].mxu0
      %1203 = vmatprep.mubr.f32.mxu0 0.0
      %1204 = vmatmul.mubr.f32.gmra.mrb[0].mxu0 %v430
      %v1205 = vpop.f32.mrb[0].mxu0
      %v1206 = vadd.f32 0.0, %v1205
      %v1207 = vpop.f32.mrb[0].mxu0
      %1208 = vmatprep.mubr.f32.mxu0 0.0
      %1209 = vmatmul.mubr.f32.gmra.mrb[0].mxu0 %v433
      %v1210 = vpop.f32.mrb[0].mxu0
      %v1211 = vadd.f32 0.0, %v1210
      %v1212 = vpop.f32.mrb[0].mxu0
      %1213 = vdwg.mxu0
      %v1214 = vld [vmem:[#allocation2] sm:$0xff]
      %v1215 = vld [vmem:[#allocation2 + $0x8] sm:$0x7f]
      %v1216 = vld [vmem:[#allocation2 + $0x10] sm:$0xff]
      %v1217 = vld [vmem:[#allocation2 + $0x18] sm:$0x7f]
      %v1218 = vld [vmem:[#allocation2 + $0x20] sm:$0xff]
      %v1219 = vld [vmem:[#allocation2 + $0x28] sm:$0x7f]
      %v1220 = vld [vmem:[#allocation2 + $0x30] sm:$0xff]
      %v1221 = vld [vmem:[#allocation2 + $0x38] sm:$0x7f]
      %v1230 = vrot.slane %v1176, 1
      %v1231 = vrot.slane %v1181, 1
      %v1232 = vsel %vm808, %v1230, %v1231
      %v1233 = vrot.slane %v1186, 1
      %v1234 = vrot.slane %v1191, 1
      %v1235 = vsel %vm808, %v1233, %v1234
      %v1236 = vrot.slane %v1196, 1
      %v1237 = vrot.slane %v1201, 1
      %v1238 = vsel %vm808, %v1236, %v1237
      %v1239 = vrot.slane %v1206, 1
      %v1240 = vrot.slane %v1211, 1
      %v1241 = vsel %vm808, %v1239, %v1240
      %v1250 = vadd.f32 %v1214, %v1232
      %v1251 = vadd.f32 %v1215, %v1231
      %v1252 = vadd.f32 %v1216, %v1235
      %v1253 = vadd.f32 %v1217, %v1234
      %v1254 = vadd.f32 %v1218, %v1238
      %v1255 = vadd.f32 %v1219, %v1237
      %v1256 = vadd.f32 %v1220, %v1241
      %v1257 = vadd.f32 %v1221, %v1240
      %1258 = vst.msk [vmem:[#allocation2] sm:$0xff] %vm401, %v1250
      %1259 = vst.msk [vmem:[#allocation2 + $0x8] sm:$0x7f] %vm556, %v1251
      %1260 = vst.msk [vmem:[#allocation2 + $0x10] sm:$0xff] %vm401, %v1252
      %1261 = vst.msk [vmem:[#allocation2 + $0x18] sm:$0x7f] %vm556, %v1253
      %1262 = vst.msk [vmem:[#allocation2 + $0x20] sm:$0xff] %vm401, %v1254
      %1263 = vst.msk [vmem:[#allocation2 + $0x28] sm:$0x7f] %vm556, %v1255
      %1264 = vst.msk [vmem:[#allocation2 + $0x30] sm:$0xff] %vm401, %v1256
      %1265 = vst.msk [vmem:[#allocation2 + $0x38] sm:$0x7f] %vm556, %v1257
      %s1266 = scalar_lea.vmem %s3, 24
      %v1267 = vld [vmem:[%s1266] sm:$0xf]
      %v1269 = vsel %vm435, %v1267, 0
      %1271 = vmatprep.subr.mxu0 0.0
      %1272 = vmatpush1.msra.mxu0 %v1269
      %1273 = vmatprep.subr.mxu0 0.0
      %1274 = vmatpush1.msra.mxu0 0.0
      %1275 = vmatprep.subr.mxu0 0.0
      %1276 = vmatpush1.msra.mxu0 0.0
      %1277 = vmatprep.subr.mxu0 0.0
      %1278 = vmatpush1.msra.mxu0 0.0
      %1279 = vmatprep.subr.mxu0 0.0
      %1280 = vmatpush1.msra.mxu0 0.0
      %1281 = vmatprep.subr.mxu0 0.0
      %1282 = vmatpush1.msra.mxu0 0.0
      %1283 = vmatprep.subr.mxu0 0.0
      %1284 = vmatpush1.msra.mxu0 0.0
      %1285 = vmatprep.subr.mxu0 0.0
      %1286 = vmatpush1.msra.mxu0 0.0
      %1287 = vmatprep.subr.mxu0 0.0
      %1288 = vmatpush1.msra.mxu0 0.0
      %1289 = vmatprep.subr.mxu0 0.0
      %1290 = vmatpush1.msra.mxu0 0.0
      %1291 = vmatprep.subr.mxu0 0.0
      %1292 = vmatpush1.msra.mxu0 0.0
      %1293 = vmatprep.subr.mxu0 0.0
      %1294 = vmatpush1.msra.mxu0 0.0
      %1295 = vmatprep.subr.mxu0 0.0
      %1296 = vmatpush1.msra.mxu0 0.0
      %1297 = vmatprep.subr.mxu0 0.0
      %1298 = vmatpush1.msra.mxu0 0.0
      %1299 = vmatprep.subr.mxu0 0.0
      %1300 = vmatpush1.msra.mxu0 0.0
      %1301 = vmatprep.subr.mxu0 0.0
      %1302 = vmatpush1.msra.mxu0 0.0
      %1303 = vmatprep.subr.mxu0 0.0
      %1304 = vmatpush1.msra.mxu0 0.0
      %1305 = vmatprep.subr.mxu0 0.0
      %1306 = vmatpush1.msra.mxu0 0.0
      %1307 = vmatprep.subr.mxu0 0.0
      %1308 = vmatpush1.msra.mxu0 0.0
      %1309 = vmatprep.subr.mxu0 0.0
      %1310 = vmatpush1.msra.mxu0 0.0
      %1311 = vmatprep.subr.mxu0 0.0
      %1312 = vmatpush1.msra.mxu0 0.0
      %1313 = vmatprep.subr.mxu0 0.0
      %1314 = vmatpush1.msra.mxu0 0.0
      %1315 = vmatprep.subr.mxu0 0.0
      %1316 = vmatpush1.msra.mxu0 0.0
      %1317 = vmatprep.subr.mxu0 0.0
      %1318 = vmatpush1.msra.mxu0 0.0
      %1319 = vmatprep.subr.mxu0 0.0
      %1320 = vmatpush1.msra.mxu0 0.0
      %1321 = vmatprep.subr.mxu0 0.0
      %1322 = vmatpush1.msra.mxu0 0.0
      %1323 = vmatprep.subr.mxu0 0.0
      %1324 = vmatpush1.msra.mxu0 0.0
      %1325 = vmatprep.subr.mxu0 0.0
      %1326 = vmatpush1.msra.mxu0 0.0
      %1327 = vmatprep.subr.mxu0 0.0
      %1328 = vmatpush1.msra.mxu0 0.0
      %1329 = vmatprep.subr.mxu0 0.0
      %1330 = vmatpush1.msra.mxu0 0.0
      %1331 = vmatprep.subr.mxu0 0.0
      %1332 = vmatpush1.msra.mxu0 0.0
      %1333 = vmatprep.subr.mxu0 0.0
      %1334 = vmatpush1.msra.mxu0 0.0
      %1335 = vmatprep.mubr.f32.mxu0 0.0
      %1336 = vmatmul.mubr.f32.gmra.mrb[0].mxu0 %v412
      %v1337 = vpop.f32.mrb[0].mxu0
      %v1338 = vpop.f32.mrb[0].mxu0
      %1339 = vmatprep.mubr.f32.mxu0 0.0
      %1340 = vmatmul.mubr.f32.gmra.mrb[0].mxu0 %v415
      %v1341 = vpop.f32.mrb[0].mxu0
      %v1342 = vpop.f32.mrb[0].mxu0
      %1343 = vmatprep.mubr.f32.mxu0 0.0
      %1344 = vmatmul.mubr.f32.gmra.mrb[0].mxu0 %v418
      %v1345 = vpop.f32.mrb[0].mxu0
      %v1346 = vadd.f32 0.0, %v1345
      %v1347 = vpop.f32.mrb[0].mxu0
      %1348 = vmatprep.mubr.f32.mxu0 0.0
      %1349 = vmatmul.mubr.f32.gmra.mrb[0].mxu0 %v421
      %v1350 = vpop.f32.mrb[0].mxu0
      %v1351 = vadd.f32 0.0, %v1350
      %v1352 = vpop.f32.mrb[0].mxu0
      %1353 = vmatprep.mubr.f32.mxu0 0.0
      %1354 = vmatmul.mubr.f32.gmra.mrb[0].mxu0 %v424
      %v1355 = vpop.f32.mrb[0].mxu0
      %v1356 = vadd.f32 0.0, %v1355
      %v1357 = vpop.f32.mrb[0].mxu0
      %1358 = vmatprep.mubr.f32.mxu0 0.0
      %1359 = vmatmul.mubr.f32.gmra.mrb[0].mxu0 %v427
      %v1360 = vpop.f32.mrb[0].mxu0
      %v1361 = vadd.f32 0.0, %v1360
      %v1362 = vpop.f32.mrb[0].mxu0
      %1363 = vmatprep.mubr.f32.mxu0 0.0
      %1364 = vmatmul.mubr.f32.gmra.mrb[0].mxu0 %v430
      %v1365 = vpop.f32.mrb[0].mxu0
      %v1366 = vadd.f32 0.0, %v1365
      %v1367 = vpop.f32.mrb[0].mxu0
      %1368 = vmatprep.mubr.f32.mxu0 0.0
      %1369 = vmatmul.mubr.f32.gmra.mrb[0].mxu0 %v433
      %v1370 = vpop.f32.mrb[0].mxu0
      %v1371 = vadd.f32 0.0, %v1370
      %v1372 = vpop.f32.mrb[0].mxu0
      %1373 = vdwg.mxu0
      %v1374 = vld [vmem:[#allocation2 + $0x1] sm:$0xff]
      %v1375 = vld [vmem:[#allocation2 + $0x9] sm:$0x7f]
      %v1376 = vld [vmem:[#allocation2 + $0x11] sm:$0xff]
      %v1377 = vld [vmem:[#allocation2 + $0x19] sm:$0x7f]
      %v1378 = vld [vmem:[#allocation2 + $0x21] sm:$0xff]
      %v1379 = vld [vmem:[#allocation2 + $0x29] sm:$0x7f]
      %v1380 = vadd.f32 %v1374, %v1346
      %v1381 = vadd.f32 %v1375, %v1351
      %v1382 = vadd.f32 %v1376, %v1356
      %v1383 = vadd.f32 %v1377, %v1361
      %v1384 = vadd.f32 %v1378, %v1366
      %v1385 = vadd.f32 %v1379, %v1371
      %1386 = vst.msk [vmem:[#allocation2 + $0x1] sm:$0xff] %vm401, %v1380
      %1387 = vst.msk [vmem:[#allocation2 + $0x9] sm:$0x7f] %vm556, %v1381
      %1388 = vst.msk [vmem:[#allocation2 + $0x11] sm:$0xff] %vm401, %v1382
      %1389 = vst.msk [vmem:[#allocation2 + $0x19] sm:$0x7f] %vm556, %v1383
      %1390 = vst.msk [vmem:[#allocation2 + $0x21] sm:$0xff] %vm401, %v1384
      %1391 = vst.msk [vmem:[#allocation2 + $0x29] sm:$0x7f] %vm556, %v1385
      %s1392 = scalar_lea.vmem %s3, 28
      %v1393 = vld [vmem:[%s1392] sm:$0xf]
      %v1395 = vsel %vm435, %v1393, 0
      %1397 = vmatprep.subr.mxu0 0.0
      %1398 = vmatpush1.msra.mxu0 %v1395
      %1399 = vmatprep.subr.mxu0 0.0
      %1400 = vmatpush1.msra.mxu0 0.0
      %1401 = vmatprep.subr.mxu0 0.0
      %1402 = vmatpush1.msra.mxu0 0.0
      %1403 = vmatprep.subr.mxu0 0.0
      %1404 = vmatpush1.msra.mxu0 0.0
      %1405 = vmatprep.subr.mxu0 0.0
      %1406 = vmatpush1.msra.mxu0 0.0
      %1407 = vmatprep.subr.mxu0 0.0
      %1408 = vmatpush1.msra.mxu0 0.0
      %1409 = vmatprep.subr.mxu0 0.0
      %1410 = vmatpush1.msra.mxu0 0.0
      %1411 = vmatprep.subr.mxu0 0.0
      %1412 = vmatpush1.msra.mxu0 0.0
      %1413 = vmatprep.subr.mxu0 0.0
      %1414 = vmatpush1.msra.mxu0 0.0
      %1415 = vmatprep.subr.mxu0 0.0
      %1416 = vmatpush1.msra.mxu0 0.0
      %1417 = vmatprep.subr.mxu0 0.0
      %1418 = vmatpush1.msra.mxu0 0.0
      %1419 = vmatprep.subr.mxu0 0.0
      %1420 = vmatpush1.msra.mxu0 0.0
      %1421 = vmatprep.subr.mxu0 0.0
      %1422 = vmatpush1.msra.mxu0 0.0
      %1423 = vmatprep.subr.mxu0 0.0
      %1424 = vmatpush1.msra.mxu0 0.0
      %1425 = vmatprep.subr.mxu0 0.0
      %1426 = vmatpush1.msra.mxu0 0.0
      %1427 = vmatprep.subr.mxu0 0.0
      %1428 = vmatpush1.msra.mxu0 0.0
      %1429 = vmatprep.subr.mxu0 0.0
      %1430 = vmatpush1.msra.mxu0 0.0
      %1431 = vmatprep.subr.mxu0 0.0
      %1432 = vmatpush1.msra.mxu0 0.0
      %1433 = vmatprep.subr.mxu0 0.0
      %1434 = vmatpush1.msra.mxu0 0.0
      %1435 = vmatprep.subr.mxu0 0.0
      %1436 = vmatpush1.msra.mxu0 0.0
      %1437 = vmatprep.subr.mxu0 0.0
      %1438 = vmatpush1.msra.mxu0 0.0
      %1439 = vmatprep.subr.mxu0 0.0
      %1440 = vmatpush1.msra.mxu0 0.0
      %1441 = vmatprep.subr.mxu0 0.0
      %1442 = vmatpush1.msra.mxu0 0.0
      %1443 = vmatprep.subr.mxu0 0.0
      %1444 = vmatpush1.msra.mxu0 0.0
      %1445 = vmatprep.subr.mxu0 0.0
      %1446 = vmatpush1.msra.mxu0 0.0
      %1447 = vmatprep.subr.mxu0 0.0
      %1448 = vmatpush1.msra.mxu0 0.0
      %1449 = vmatprep.subr.mxu0 0.0
      %1450 = vmatpush1.msra.mxu0 0.0
      %1451 = vmatprep.subr.mxu0 0.0
      %1452 = vmatpush1.msra.mxu0 0.0
      %1453 = vmatprep.subr.mxu0 0.0
      %1454 = vmatpush1.msra.mxu0 0.0
      %1455 = vmatprep.subr.mxu0 0.0
      %1456 = vmatpush1.msra.mxu0 0.0
      %1457 = vmatprep.subr.mxu0 0.0
      %1458 = vmatpush1.msra.mxu0 0.0
      %1459 = vmatprep.subr.mxu0 0.0
      %1460 = vmatpush1.msra.mxu0 0.0
      %1461 = vmatprep.mubr.f32.mxu0 0.0
      %1462 = vmatmul.mubr.f32.gmra.mrb[0].mxu0 %v412
      %v1463 = vpop.f32.mrb[0].mxu0
      %v1464 = vpop.f32.mrb[0].mxu0
      %1465 = vmatprep.mubr.f32.mxu0 0.0
      %1466 = vmatmul.mubr.f32.gmra.mrb[0].mxu0 %v415
      %v1467 = vpop.f32.mrb[0].mxu0
      %v1468 = vpop.f32.mrb[0].mxu0
      %1469 = vmatprep.mubr.f32.mxu0 0.0
      %1470 = vmatmul.mubr.f32.gmra.mrb[0].mxu0 %v418
      %v1471 = vpop.f32.mrb[0].mxu0
      %v1472 = vadd.f32 0.0, %v1471
      %v1473 = vpop.f32.mrb[0].mxu0
      %1474 = vmatprep.mubr.f32.mxu0 0.0
      %1475 = vmatmul.mubr.f32.gmra.mrb[0].mxu0 %v421
      %v1476 = vpop.f32.mrb[0].mxu0
      %v1477 = vadd.f32 0.0, %v1476
      %v1478 = vpop.f32.mrb[0].mxu0
      %1479 = vmatprep.mubr.f32.mxu0 0.0
      %1480 = vmatmul.mubr.f32.gmra.mrb[0].mxu0 %v424
      %v1481 = vpop.f32.mrb[0].mxu0
      %v1482 = vadd.f32 0.0, %v1481
      %v1483 = vpop.f32.mrb[0].mxu0
      %1484 = vmatprep.mubr.f32.mxu0 0.0
      %1485 = vmatmul.mubr.f32.gmra.mrb[0].mxu0 %v427
      %v1486 = vpop.f32.mrb[0].mxu0
      %v1487 = vadd.f32 0.0, %v1486
      %v1488 = vpop.f32.mrb[0].mxu0
      %1489 = vmatprep.mubr.f32.mxu0 0.0
      %1490 = vmatmul.mubr.f32.gmra.mrb[0].mxu0 %v430
      %v1491 = vpop.f32.mrb[0].mxu0
      %v1492 = vadd.f32 0.0, %v1491
      %v1493 = vpop.f32.mrb[0].mxu0
      %1494 = vmatprep.mubr.f32.mxu0 0.0
      %1495 = vmatmul.mubr.f32.gmra.mrb[0].mxu0 %v433
      %v1496 = vpop.f32.mrb[0].mxu0
      %v1497 = vadd.f32 0.0, %v1496
      %v1498 = vpop.f32.mrb[0].mxu0
      %1499 = vdwg.mxu0
      %v1500 = vld [vmem:[#allocation2] sm:$0xff]
      %v1501 = vld [vmem:[#allocation2 + $0x8] sm:$0xff]
      %v1502 = vld [vmem:[#allocation2 + $0x10] sm:$0xff]
      %v1503 = vld [vmem:[#allocation2 + $0x18] sm:$0xff]
      %v1504 = vld [vmem:[#allocation2 + $0x20] sm:$0xff]
      %v1505 = vld [vmem:[#allocation2 + $0x28] sm:$0xff]
      %v1506 = vadd.f32 %v1500, %v1472
      %v1507 = vadd.f32 %v1501, %v1477
      %v1508 = vadd.f32 %v1502, %v1482
      %v1509 = vadd.f32 %v1503, %v1487
      %v1510 = vadd.f32 %v1504, %v1492
      %v1511 = vadd.f32 %v1505, %v1497
      %1512 = vst.msk [vmem:[#allocation2] sm:$0xff] %vm401, %v1506
      %1513 = vst.msk [vmem:[#allocation2 + $0x8] sm:$0xff] %vm401, %v1507
      %1514 = vst.msk [vmem:[#allocation2 + $0x10] sm:$0xff] %vm401, %v1508
      %1515 = vst.msk [vmem:[#allocation2 + $0x18] sm:$0xff] %vm401, %v1509
      %1516 = vst.msk [vmem:[#allocation2 + $0x20] sm:$0xff] %vm401, %v1510
      %1517 = vst.msk [vmem:[#allocation2 + $0x28] sm:$0xff] %vm401, %v1511
      %s1518 = scalar_lea.vmem %s3, 32
      %v1519 = vld [vmem:[%s1518] sm:$0xf]
      %v1521 = vsel %vm435, %v1519, 0
      %1523 = vmatprep.subr.mxu0 0.0
      %1524 = vmatpush1.msra.mxu0 %v1521
      %1525 = vmatprep.subr.mxu0 0.0
      %1526 = vmatpush1.msra.mxu0 0.0
      %1527 = vmatprep.subr.mxu0 0.0
      %1528 = vmatpush1.msra.mxu0 0.0
      %1529 = vmatprep.subr.mxu0 0.0
      %1530 = vmatpush1.msra.mxu0 0.0
      %1531 = vmatprep.subr.mxu0 0.0
      %1532 = vmatpush1.msra.mxu0 0.0
      %1533 = vmatprep.subr.mxu0 0.0
      %1534 = vmatpush1.msra.mxu0 0.0
      %1535 = vmatprep.subr.mxu0 0.0
      %1536 = vmatpush1.msra.mxu0 0.0
      %1537 = vmatprep.subr.mxu0 0.0
      %1538 = vmatpush1.msra.mxu0 0.0
      %1539 = vmatprep.subr.mxu0 0.0
      %1540 = vmatpush1.msra.mxu0 0.0
      %1541 = vmatprep.subr.mxu0 0.0
      %1542 = vmatpush1.msra.mxu0 0.0
      %1543 = vmatprep.subr.mxu0 0.0
      %1544 = vmatpush1.msra.mxu0 0.0
      %1545 = vmatprep.subr.mxu0 0.0
      %1546 = vmatpush1.msra.mxu0 0.0
      %1547 = vmatprep.subr.mxu0 0.0
      %1548 = vmatpush1.msra.mxu0 0.0
      %1549 = vmatprep.subr.mxu0 0.0
      %1550 = vmatpush1.msra.mxu0 0.0
      %1551 = vmatprep.subr.mxu0 0.0
      %1552 = vmatpush1.msra.mxu0 0.0
      %1553 = vmatprep.subr.mxu0 0.0
      %1554 = vmatpush1.msra.mxu0 0.0
      %1555 = vmatprep.subr.mxu0 0.0
      %1556 = vmatpush1.msra.mxu0 0.0
      %1557 = vmatprep.subr.mxu0 0.0
      %1558 = vmatpush1.msra.mxu0 0.0
      %1559 = vmatprep.subr.mxu0 0.0
      %1560 = vmatpush1.msra.mxu0 0.0
      %1561 = vmatprep.subr.mxu0 0.0
      %1562 = vmatpush1.msra.mxu0 0.0
      %1563 = vmatprep.subr.mxu0 0.0
      %1564 = vmatpush1.msra.mxu0 0.0
      %1565 = vmatprep.subr.mxu0 0.0
      %1566 = vmatpush1.msra.mxu0 0.0
      %1567 = vmatprep.subr.mxu0 0.0
      %1568 = vmatpush1.msra.mxu0 0.0
      %1569 = vmatprep.subr.mxu0 0.0
      %1570 = vmatpush1.msra.mxu0 0.0
      %1571 = vmatprep.subr.mxu0 0.0
      %1572 = vmatpush1.msra.mxu0 0.0
      %1573 = vmatprep.subr.mxu0 0.0
      %1574 = vmatpush1.msra.mxu0 0.0
      %1575 = vmatprep.subr.mxu0 0.0
      %1576 = vmatpush1.msra.mxu0 0.0
      %1577 = vmatprep.subr.mxu0 0.0
      %1578 = vmatpush1.msra.mxu0 0.0
      %1579 = vmatprep.subr.mxu0 0.0
      %1580 = vmatpush1.msra.mxu0 0.0
      %1581 = vmatprep.subr.mxu0 0.0
      %1582 = vmatpush1.msra.mxu0 0.0
      %1583 = vmatprep.subr.mxu0 0.0
      %1584 = vmatpush1.msra.mxu0 0.0
      %1585 = vmatprep.subr.mxu0 0.0
      %1586 = vmatpush1.msra.mxu0 0.0
      %1587 = vmatprep.mubr.f32.mxu0 0.0
      %1588 = vmatmul.mubr.f32.gmra.mrb[0].mxu0 %v412
      %v1589 = vpop.f32.mrb[0].mxu0
      %v1590 = vpop.f32.mrb[0].mxu0
      %1591 = vmatprep.mubr.f32.mxu0 0.0
      %1592 = vmatmul.mubr.f32.gmra.mrb[0].mxu0 %v415
      %v1593 = vpop.f32.mrb[0].mxu0
      %v1594 = vpop.f32.mrb[0].mxu0
      %1595 = vmatprep.mubr.f32.mxu0 0.0
      %1596 = vmatmul.mubr.f32.gmra.mrb[0].mxu0 %v418
      %v1597 = vpop.f32.mrb[0].mxu0
      %v1598 = vadd.f32 0.0, %v1597
      %v1599 = vpop.f32.mrb[0].mxu0
      %1600 = vmatprep.mubr.f32.mxu0 0.0
      %1601 = vmatmul.mubr.f32.gmra.mrb[0].mxu0 %v421
      %v1602 = vpop.f32.mrb[0].mxu0
      %v1603 = vadd.f32 0.0, %v1602
      %v1604 = vpop.f32.mrb[0].mxu0
      %1605 = vmatprep.mubr.f32.mxu0 0.0
      %1606 = vmatmul.mubr.f32.gmra.mrb[0].mxu0 %v424
      %v1607 = vpop.f32.mrb[0].mxu0
      %v1608 = vadd.f32 0.0, %v1607
      %v1609 = vpop.f32.mrb[0].mxu0
      %1610 = vmatprep.mubr.f32.mxu0 0.0
      %1611 = vmatmul.mubr.f32.gmra.mrb[0].mxu0 %v427
      %v1612 = vpop.f32.mrb[0].mxu0
      %v1613 = vadd.f32 0.0, %v1612
      %v1614 = vpop.f32.mrb[0].mxu0
      %1615 = vmatprep.mubr.f32.mxu0 0.0
      %1616 = vmatmul.mubr.f32.gmra.mrb[0].mxu0 %v430
      %v1617 = vpop.f32.mrb[0].mxu0
      %v1618 = vadd.f32 0.0, %v1617
      %v1619 = vpop.f32.mrb[0].mxu0
      %1620 = vmatprep.mubr.f32.mxu0 0.0
      %1621 = vmatmul.mubr.f32.gmra.mrb[0].mxu0 %v433
      %v1622 = vpop.f32.mrb[0].mxu0
      %v1623 = vadd.f32 0.0, %v1622
      %v1624 = vpop.f32.mrb[0].mxu0
      %1625 = vdwg.mxu0
      %v1626 = vld [vmem:[#allocation2] sm:$0xff]
      %v1627 = vld [vmem:[#allocation2 + $0x8] sm:$0x7f]
      %v1628 = vld [vmem:[#allocation2 + $0x10] sm:$0xff]
      %v1629 = vld [vmem:[#allocation2 + $0x18] sm:$0x7f]
      %v1630 = vld [vmem:[#allocation2 + $0x20] sm:$0xff]
      %v1631 = vld [vmem:[#allocation2 + $0x28] sm:$0x7f]
      %v1638 = vrot.slane %v1598, 1
      %v1639 = vrot.slane %v1603, 1
      %v1640 = vsel %vm808, %v1638, %v1639
      %v1641 = vrot.slane %v1608, 1
      %v1642 = vrot.slane %v1613, 1
      %v1643 = vsel %vm808, %v1641, %v1642
      %v1644 = vrot.slane %v1618, 1
      %v1645 = vrot.slane %v1623, 1
      %v1646 = vsel %vm808, %v1644, %v1645
      %v1653 = vadd.f32 %v1626, %v1640
      %v1654 = vadd.f32 %v1627, %v1639
      %v1655 = vadd.f32 %v1628, %v1643
      %v1656 = vadd.f32 %v1629, %v1642
      %v1657 = vadd.f32 %v1630, %v1646
      %v1658 = vadd.f32 %v1631, %v1645
      %1659 = vst.msk [vmem:[#allocation2] sm:$0xff] %vm401, %v1653
      %1660 = vst.msk [vmem:[#allocation2 + $0x8] sm:$0x7f] %vm556, %v1654
      %1661 = vst.msk [vmem:[#allocation2 + $0x10] sm:$0xff] %vm401, %v1655
      %1662 = vst.msk [vmem:[#allocation2 + $0x18] sm:$0x7f] %vm556, %v1656
      %1663 = vst.msk [vmem:[#allocation2 + $0x20] sm:$0xff] %vm401, %v1657
      %1664 = vst.msk [vmem:[#allocation2 + $0x28] sm:$0x7f] %vm556, %v1658
      %p1665 = scmp.gt.s32.totalorder %s21, 0
      // Predicated region
      $region41: #{tpu_custom_call.1} parent=39 // pred_check
        %p1666 = pneg %p1665
      $region42: #{tpu_custom_call.1} parent=39 // pred_check_branch
        %1668 = sbr.rel (%p1666) target = $region44
      $region43: #{tpu_custom_call.1} parent=39 // pred_region
        %v1669 = vld [vmem:[%s360] sm:$0xff]
        %v1670 = vld [vmem:[%s360 + $0x8] sm:$0xff]
        %v1671 = vld [vmem:[%s3] sm:$0xf]
        %v1673 = vsel %vm401, %v1669, 0
        %v1676 = vsel %vm401, %v1670, 0
        %v1679 = vsel %vm435, %v1671, 0
        %1681 = vmatprep.subr.mxu0 0.0
        %1682 = vmatpush1.msra.mxu0 %v1679
        %1683 = vmatprep.subr.mxu0 0.0
        %1684 = vmatpush1.msra.mxu0 0.0
        %1685 = vmatprep.subr.mxu0 0.0
        %1686 = vmatpush1.msra.mxu0 0.0
        %1687 = vmatprep.subr.mxu0 0.0
        %1688 = vmatpush1.msra.mxu0 0.0
        %1689 = vmatprep.subr.mxu0 0.0
        %1690 = vmatpush1.msra.mxu0 0.0
        %1691 = vmatprep.subr.mxu0 0.0
        %1692 = vmatpush1.msra.mxu0 0.0
        %1693 = vmatprep.subr.mxu0 0.0
        %1694 = vmatpush1.msra.mxu0 0.0
        %1695 = vmatprep.subr.mxu0 0.0
        %1696 = vmatpush1.msra.mxu0 0.0
        %1697 = vmatprep.subr.mxu0 0.0
        %1698 = vmatpush1.msra.mxu0 0.0
        %1699 = vmatprep.subr.mxu0 0.0
        %1700 = vmatpush1.msra.mxu0 0.0
        %1701 = vmatprep.subr.mxu0 0.0
        %1702 = vmatpush1.msra.mxu0 0.0
        %1703 = vmatprep.subr.mxu0 0.0
        %1704 = vmatpush1.msra.mxu0 0.0
        %1705 = vmatprep.subr.mxu0 0.0
        %1706 = vmatpush1.msra.mxu0 0.0
        %1707 = vmatprep.subr.mxu0 0.0
        %1708 = vmatpush1.msra.mxu0 0.0
        %1709 = vmatprep.subr.mxu0 0.0
        %1710 = vmatpush1.msra.mxu0 0.0
        %1711 = vmatprep.subr.mxu0 0.0
        %1712 = vmatpush1.msra.mxu0 0.0
        %1713 = vmatprep.subr.mxu0 0.0
        %1714 = vmatpush1.msra.mxu0 0.0
        %1715 = vmatprep.subr.mxu0 0.0
        %1716 = vmatpush1.msra.mxu0 0.0
        %1717 = vmatprep.subr.mxu0 0.0
        %1718 = vmatpush1.msra.mxu0 0.0
        %1719 = vmatprep.subr.mxu0 0.0
        %1720 = vmatpush1.msra.mxu0 0.0
        %1721 = vmatprep.subr.mxu0 0.0
        %1722 = vmatpush1.msra.mxu0 0.0
        %1723 = vmatprep.subr.mxu0 0.0
        %1724 = vmatpush1.msra.mxu0 0.0
        %1725 = vmatprep.subr.mxu0 0.0
        %1726 = vmatpush1.msra.mxu0 0.0
        %1727 = vmatprep.subr.mxu0 0.0
        %1728 = vmatpush1.msra.mxu0 0.0
        %1729 = vmatprep.subr.mxu0 0.0
        %1730 = vmatpush1.msra.mxu0 0.0
        %1731 = vmatprep.subr.mxu0 0.0
        %1732 = vmatpush1.msra.mxu0 0.0
        %1733 = vmatprep.subr.mxu0 0.0
        %1734 = vmatpush1.msra.mxu0 0.0
        %1735 = vmatprep.subr.mxu0 0.0
        %1736 = vmatpush1.msra.mxu0 0.0
        %1737 = vmatprep.subr.mxu0 0.0
        %1738 = vmatpush1.msra.mxu0 0.0
        %1739 = vmatprep.subr.mxu0 0.0
        %1740 = vmatpush1.msra.mxu0 0.0
        %1741 = vmatprep.subr.mxu0 0.0
        %1742 = vmatpush1.msra.mxu0 0.0
        %1743 = vmatprep.subr.mxu0 0.0
        %1744 = vmatpush1.msra.mxu0 0.0
        %1745 = vmatprep.mubr.f32.mxu0 0.0
        %1746 = vmatmul.mubr.f32.gmra.mrb[0].mxu0 %v1673
        %v1747 = vpop.f32.mrb[0].mxu0
        %v1748 = vadd.f32 0.0, %v1747
        %v1749 = vpop.f32.mrb[0].mxu0
        %1750 = vmatprep.mubr.f32.mxu0 0.0
        %1751 = vmatmul.mubr.f32.gmra.mrb[0].mxu0 %v1676
        %v1752 = vpop.f32.mrb[0].mxu0
        %v1753 = vadd.f32 0.0, %v1752
        %v1754 = vpop.f32.mrb[0].mxu0
        %1755 = vdwg.mxu0
        %v1756 = vld [vmem:[#allocation2 + $0x1] sm:$0xff]
        %v1757 = vld [vmem:[#allocation2 + $0x9] sm:$0x7f]
        %v1758 = vadd.f32 %v1756, %v1748
        %v1759 = vadd.f32 %v1757, %v1753
        %1760 = vst.msk [vmem:[#allocation2 + $0x1] sm:$0xff] %vm401, %v1758
        %1761 = vst.msk [vmem:[#allocation2 + $0x9] sm:$0x7f] %vm556, %v1759
        %v1762 = vld [vmem:[%s562] sm:$0xf]
        %v1764 = vsel %vm435, %v1762, 0
        %1766 = vmatprep.subr.mxu0 0.0
        %1767 = vmatpush1.msra.mxu0 %v1764
        %1768 = vmatprep.subr.mxu0 0.0
        %1769 = vmatpush1.msra.mxu0 0.0
        %1770 = vmatprep.subr.mxu0 0.0
        %1771 = vmatpush1.msra.mxu0 0.0
        %1772 = vmatprep.subr.mxu0 0.0
        %1773 = vmatpush1.msra.mxu0 0.0
        %1774 = vmatprep.subr.mxu0 0.0
        %1775 = vmatpush1.msra.mxu0 0.0
        %1776 = vmatprep.subr.mxu0 0.0
        %1777 = vmatpush1.msra.mxu0 0.0
        %1778 = vmatprep.subr.mxu0 0.0
        %1779 = vmatpush1.msra.mxu0 0.0
        %1780 = vmatprep.subr.mxu0 0.0
        %1781 = vmatpush1.msra.mxu0 0.0
        %1782 = vmatprep.subr.mxu0 0.0
        %1783 = vmatpush1.msra.mxu0 0.0
        %1784 = vmatprep.subr.mxu0 0.0
        %1785 = vmatpush1.msra.mxu0 0.0
        %1786 = vmatprep.subr.mxu0 0.0
        %1787 = vmatpush1.msra.mxu0 0.0
        %1788 = vmatprep.subr.mxu0 0.0
        %1789 = vmatpush1.msra.mxu0 0.0
        %1790 = vmatprep.subr.mxu0 0.0
        %1791 = vmatpush1.msra.mxu0 0.0
        %1792 = vmatprep.subr.mxu0 0.0
        %1793 = vmatpush1.msra.mxu0 0.0
        %1794 = vmatprep.subr.mxu0 0.0
        %1795 = vmatpush1.msra.mxu0 0.0
        %1796 = vmatprep.subr.mxu0 0.0
        %1797 = vmatpush1.msra.mxu0 0.0
        %1798 = vmatprep.subr.mxu0 0.0
        %1799 = vmatpush1.msra.mxu0 0.0
        %1800 = vmatprep.subr.mxu0 0.0
        %1801 = vmatpush1.msra.mxu0 0.0
        %1802 = vmatprep.subr.mxu0 0.0
        %1803 = vmatpush1.msra.mxu0 0.0
        %1804 = vmatprep.subr.mxu0 0.0
        %1805 = vmatpush1.msra.mxu0 0.0
        %1806 = vmatprep.subr.mxu0 0.0
        %1807 = vmatpush1.msra.mxu0 0.0
        %1808 = vmatprep.subr.mxu0 0.0
        %1809 = vmatpush1.msra.mxu0 0.0
        %1810 = vmatprep.subr.mxu0 0.0
        %1811 = vmatpush1.msra.mxu0 0.0
        %1812 = vmatprep.subr.mxu0 0.0
        %1813 = vmatpush1.msra.mxu0 0.0
        %1814 = vmatprep.subr.mxu0 0.0
        %1815 = vmatpush1.msra.mxu0 0.0
        %1816 = vmatprep.subr.mxu0 0.0
        %1817 = vmatpush1.msra.mxu0 0.0
        %1818 = vmatprep.subr.mxu0 0.0
        %1819 = vmatpush1.msra.mxu0 0.0
        %1820 = vmatprep.subr.mxu0 0.0
        %1821 = vmatpush1.msra.mxu0 0.0
        %1822 = vmatprep.subr.mxu0 0.0
        %1823 = vmatpush1.msra.mxu0 0.0
        %1824 = vmatprep.subr.mxu0 0.0
        %1825 = vmatpush1.msra.mxu0 0.0
        %1826 = vmatprep.subr.mxu0 0.0
        %1827 = vmatpush1.msra.mxu0 0.0
        %1828 = vmatprep.subr.mxu0 0.0
        %1829 = vmatpush1.msra.mxu0 0.0
        %1830 = vmatprep.mubr.f32.mxu0 0.0
        %1831 = vmatmul.mubr.f32.gmra.mrb[0].mxu0 %v1673
        %v1832 = vpop.f32.mrb[0].mxu0
        %v1833 = vadd.f32 0.0, %v1832
        %v1834 = vpop.f32.mrb[0].mxu0
        %1835 = vmatprep.mubr.f32.mxu0 0.0
        %1836 = vmatmul.mubr.f32.gmra.mrb[0].mxu0 %v1676
        %v1837 = vpop.f32.mrb[0].mxu0
        %v1838 = vadd.f32 0.0, %v1837
        %v1839 = vpop.f32.mrb[0].mxu0
        %1840 = vdwg.mxu0
        %v1841 = vld [vmem:[#allocation2] sm:$0xff]
        %v1842 = vld [vmem:[#allocation2 + $0x8] sm:$0xff]
        %v1843 = vadd.f32 %v1841, %v1833
        %v1844 = vadd.f32 %v1842, %v1838
        %1845 = vst.msk [vmem:[#allocation2] sm:$0xff] %vm401, %v1843
        %1846 = vst.msk [vmem:[#allocation2 + $0x8] sm:$0xff] %vm401, %v1844
        %v1847 = vld [vmem:[%s688] sm:$0xf]
        %v1849 = vsel %vm435, %v1847, 0
        %1851 = vmatprep.subr.mxu0 0.0
        %1852 = vmatpush1.msra.mxu0 %v1849
        %1853 = vmatprep.subr.mxu0 0.0
        %1854 = vmatpush1.msra.mxu0 0.0
        %1855 = vmatprep.subr.mxu0 0.0
        %1856 = vmatpush1.msra.mxu0 0.0
        %1857 = vmatprep.subr.mxu0 0.0
        %1858 = vmatpush1.msra.mxu0 0.0
        %1859 = vmatprep.subr.mxu0 0.0
        %1860 = vmatpush1.msra.mxu0 0.0
        %1861 = vmatprep.subr.mxu0 0.0
        %1862 = vmatpush1.msra.mxu0 0.0
        %1863 = vmatprep.subr.mxu0 0.0
        %1864 = vmatpush1.msra.mxu0 0.0
        %1865 = vmatprep.subr.mxu0 0.0
        %1866 = vmatpush1.msra.mxu0 0.0
        %1867 = vmatprep.subr.mxu0 0.0
        %1868 = vmatpush1.msra.mxu0 0.0
        %1869 = vmatprep.subr.mxu0 0.0
        %1870 = vmatpush1.msra.mxu0 0.0
        %1871 = vmatprep.subr.mxu0 0.0
        %1872 = vmatpush1.msra.mxu0 0.0
        %1873 = vmatprep.subr.mxu0 0.0
        %1874 = vmatpush1.msra.mxu0 0.0
        %1875 = vmatprep.subr.mxu0 0.0
        %1876 = vmatpush1.msra.mxu0 0.0
        %1877 = vmatprep.subr.mxu0 0.0
        %1878 = vmatpush1.msra.mxu0 0.0
        %1879 = vmatprep.subr.mxu0 0.0
        %1880 = vmatpush1.msra.mxu0 0.0
        %1881 = vmatprep.subr.mxu0 0.0
        %1882 = vmatpush1.msra.mxu0 0.0
        %1883 = vmatprep.subr.mxu0 0.0
        %1884 = vmatpush1.msra.mxu0 0.0
        %1885 = vmatprep.subr.mxu0 0.0
        %1886 = vmatpush1.msra.mxu0 0.0
        %1887 = vmatprep.subr.mxu0 0.0
        %1888 = vmatpush1.msra.mxu0 0.0
        %1889 = vmatprep.subr.mxu0 0.0
        %1890 = vmatpush1.msra.mxu0 0.0
        %1891 = vmatprep.subr.mxu0 0.0
        %1892 = vmatpush1.msra.mxu0 0.0
        %1893 = vmatprep.subr.mxu0 0.0
        %1894 = vmatpush1.msra.mxu0 0.0
        %1895 = vmatprep.subr.mxu0 0.0
        %1896 = vmatpush1.msra.mxu0 0.0
        %1897 = vmatprep.subr.mxu0 0.0
        %1898 = vmatpush1.msra.mxu0 0.0
        %1899 = vmatprep.subr.mxu0 0.0
        %1900 = vmatpush1.msra.mxu0 0.0
        %1901 = vmatprep.subr.mxu0 0.0
        %1902 = vmatpush1.msra.mxu0 0.0
        %1903 = vmatprep.subr.mxu0 0.0
        %1904 = vmatpush1.msra.mxu0 0.0
        %1905 = vmatprep.subr.mxu0 0.0
        %1906 = vmatpush1.msra.mxu0 0.0
        %1907 = vmatprep.subr.mxu0 0.0
        %1908 = vmatpush1.msra.mxu0 0.0
        %1909 = vmatprep.subr.mxu0 0.0
        %1910 = vmatpush1.msra.mxu0 0.0
        %1911 = vmatprep.subr.mxu0 0.0
        %1912 = vmatpush1.msra.mxu0 0.0
        %1913 = vmatprep.subr.mxu0 0.0
        %1914 = vmatpush1.msra.mxu0 0.0
        %1915 = vmatprep.mubr.f32.mxu0 0.0
        %1916 = vmatmul.mubr.f32.gmra.mrb[0].mxu0 %v1673
        %v1917 = vpop.f32.mrb[0].mxu0
        %v1918 = vadd.f32 0.0, %v1917
        %v1919 = vpop.f32.mrb[0].mxu0
        %1920 = vmatprep.mubr.f32.mxu0 0.0
        %1921 = vmatmul.mubr.f32.gmra.mrb[0].mxu0 %v1676
        %v1922 = vpop.f32.mrb[0].mxu0
        %v1923 = vadd.f32 0.0, %v1922
        %v1924 = vpop.f32.mrb[0].mxu0
        %1925 = vdwg.mxu0
        %v1926 = vld [vmem:[#allocation2] sm:$0xff]
        %v1927 = vld [vmem:[#allocation2 + $0x8] sm:$0x7f]
        %v1930 = vrot.slane %v1918, 1
        %v1931 = vrot.slane %v1923, 1
        %v1932 = vsel %vm808, %v1930, %v1931
        %v1935 = vadd.f32 %v1926, %v1932
        %v1936 = vadd.f32 %v1927, %v1931
        %1937 = vst.msk [vmem:[#allocation2] sm:$0xff] %vm401, %v1935
        %1938 = vst.msk [vmem:[#allocation2 + $0x8] sm:$0x7f] %vm556, %v1936
      $region44: #{tpu_custom_call.1} parent=39 // pred_fallthru
        _
      %p1939 = scmp.lt.s32.totalorder %s21, 3
      // Predicated region
      $region45: #{tpu_custom_call.1} parent=39 // pred_check
        %p1940 = pneg %p1939
      $region46: #{tpu_custom_call.1} parent=39 // pred_check_branch
        %1942 = sbr.rel (%p1940) target = $region48
      $region47: #{tpu_custom_call.1} parent=39 // pred_region
        %v1943 = vld [vmem:[%s377] sm:$0xff]
        %v1944 = vld [vmem:[%s377 + $0x8] sm:$0xff]
        %v1945 = vld [vmem:[%s1266] sm:$0xf]
        %v1947 = vsel %vm401, %v1943, 0
        %v1950 = vsel %vm401, %v1944, 0
        %v1953 = vsel %vm435, %v1945, 0
        %1955 = vmatprep.subr.mxu0 0.0
        %1956 = vmatpush1.msra.mxu0 %v1953
        %1957 = vmatprep.subr.mxu0 0.0
        %1958 = vmatpush1.msra.mxu0 0.0
        %1959 = vmatprep.subr.mxu0 0.0
        %1960 = vmatpush1.msra.mxu0 0.0
        %1961 = vmatprep.subr.mxu0 0.0
        %1962 = vmatpush1.msra.mxu0 0.0
        %1963 = vmatprep.subr.mxu0 0.0
        %1964 = vmatpush1.msra.mxu0 0.0
        %1965 = vmatprep.subr.mxu0 0.0
        %1966 = vmatpush1.msra.mxu0 0.0
        %1967 = vmatprep.subr.mxu0 0.0
        %1968 = vmatpush1.msra.mxu0 0.0
        %1969 = vmatprep.subr.mxu0 0.0
        %1970 = vmatpush1.msra.mxu0 0.0
        %1971 = vmatprep.subr.mxu0 0.0
        %1972 = vmatpush1.msra.mxu0 0.0
        %1973 = vmatprep.subr.mxu0 0.0
        %1974 = vmatpush1.msra.mxu0 0.0
        %1975 = vmatprep.subr.mxu0 0.0
        %1976 = vmatpush1.msra.mxu0 0.0
        %1977 = vmatprep.subr.mxu0 0.0
        %1978 = vmatpush1.msra.mxu0 0.0
        %1979 = vmatprep.subr.mxu0 0.0
        %1980 = vmatpush1.msra.mxu0 0.0
        %1981 = vmatprep.subr.mxu0 0.0
        %1982 = vmatpush1.msra.mxu0 0.0
        %1983 = vmatprep.subr.mxu0 0.0
        %1984 = vmatpush1.msra.mxu0 0.0
        %1985 = vmatprep.subr.mxu0 0.0
        %1986 = vmatpush1.msra.mxu0 0.0
        %1987 = vmatprep.subr.mxu0 0.0
        %1988 = vmatpush1.msra.mxu0 0.0
        %1989 = vmatprep.subr.mxu0 0.0
        %1990 = vmatpush1.msra.mxu0 0.0
        %1991 = vmatprep.subr.mxu0 0.0
        %1992 = vmatpush1.msra.mxu0 0.0
        %1993 = vmatprep.subr.mxu0 0.0
        %1994 = vmatpush1.msra.mxu0 0.0
        %1995 = vmatprep.subr.mxu0 0.0
        %1996 = vmatpush1.msra.mxu0 0.0
        %1997 = vmatprep.subr.mxu0 0.0
        %1998 = vmatpush1.msra.mxu0 0.0
        %1999 = vmatprep.subr.mxu0 0.0
        %2000 = vmatpush1.msra.mxu0 0.0
        %2001 = vmatprep.subr.mxu0 0.0
        %2002 = vmatpush1.msra.mxu0 0.0
        %2003 = vmatprep.subr.mxu0 0.0
        %2004 = vmatpush1.msra.mxu0 0.0
        %2005 = vmatprep.subr.mxu0 0.0
        %2006 = vmatpush1.msra.mxu0 0.0
        %2007 = vmatprep.subr.mxu0 0.0
        %2008 = vmatpush1.msra.mxu0 0.0
        %2009 = vmatprep.subr.mxu0 0.0
        %2010 = vmatpush1.msra.mxu0 0.0
        %2011 = vmatprep.subr.mxu0 0.0
        %2012 = vmatpush1.msra.mxu0 0.0
        %2013 = vmatprep.subr.mxu0 0.0
        %2014 = vmatpush1.msra.mxu0 0.0
        %2015 = vmatprep.subr.mxu0 0.0
        %2016 = vmatpush1.msra.mxu0 0.0
        %2017 = vmatprep.subr.mxu0 0.0
        %2018 = vmatpush1.msra.mxu0 0.0
        %2019 = vmatprep.mubr.f32.mxu0 0.0
        %2020 = vmatmul.mubr.f32.gmra.mrb[0].mxu0 %v1947
        %v2021 = vpop.f32.mrb[0].mxu0
        %v2022 = vadd.f32 0.0, %v2021
        %v2023 = vpop.f32.mrb[0].mxu0
        %2024 = vmatprep.mubr.f32.mxu0 0.0
        %2025 = vmatmul.mubr.f32.gmra.mrb[0].mxu0 %v1950
        %v2026 = vpop.f32.mrb[0].mxu0
        %v2027 = vadd.f32 0.0, %v2026
        %v2028 = vpop.f32.mrb[0].mxu0
        %2029 = vdwg.mxu0
        %s2030 = scalar_lea.vmem [#allocation2], 48
        %v2031 = vld [vmem:[%s2030 + $0x1] sm:$0xff]
        %v2032 = vld [vmem:[%s2030 + $0x9] sm:$0x7f]
        %v2033 = vadd.f32 %v2031, %v2022
        %v2034 = vadd.f32 %v2032, %v2027
        %2035 = vst.msk [vmem:[%s2030 + $0x1] sm:$0xff] %vm401, %v2033
        %2036 = vst.msk [vmem:[%s2030 + $0x9] sm:$0x7f] %vm556, %v2034
        %v2037 = vld [vmem:[%s1392] sm:$0xf]
        %v2039 = vsel %vm435, %v2037, 0
        %2041 = vmatprep.subr.mxu0 0.0
        %2042 = vmatpush1.msra.mxu0 %v2039
        %2043 = vmatprep.subr.mxu0 0.0
        %2044 = vmatpush1.msra.mxu0 0.0
        %2045 = vmatprep.subr.mxu0 0.0
        %2046 = vmatpush1.msra.mxu0 0.0
        %2047 = vmatprep.subr.mxu0 0.0
        %2048 = vmatpush1.msra.mxu0 0.0
        %2049 = vmatprep.subr.mxu0 0.0
        %2050 = vmatpush1.msra.mxu0 0.0
        %2051 = vmatprep.subr.mxu0 0.0
        %2052 = vmatpush1.msra.mxu0 0.0
        %2053 = vmatprep.subr.mxu0 0.0
        %2054 = vmatpush1.msra.mxu0 0.0
        %2055 = vmatprep.subr.mxu0 0.0
        %2056 = vmatpush1.msra.mxu0 0.0
        %2057 = vmatprep.subr.mxu0 0.0
        %2058 = vmatpush1.msra.mxu0 0.0
        %2059 = vmatprep.subr.mxu0 0.0
        %2060 = vmatpush1.msra.mxu0 0.0
        %2061 = vmatprep.subr.mxu0 0.0
        %2062 = vmatpush1.msra.mxu0 0.0
        %2063 = vmatprep.subr.mxu0 0.0
        %2064 = vmatpush1.msra.mxu0 0.0
        %2065 = vmatprep.subr.mxu0 0.0
        %2066 = vmatpush1.msra.mxu0 0.0
        %2067 = vmatprep.subr.mxu0 0.0
        %2068 = vmatpush1.msra.mxu0 0.0
        %2069 = vmatprep.subr.mxu0 0.0
        %2070 = vmatpush1.msra.mxu0 0.0
        %2071 = vmatprep.subr.mxu0 0.0
        %2072 = vmatpush1.msra.mxu0 0.0
        %2073 = vmatprep.subr.mxu0 0.0
        %2074 = vmatpush1.msra.mxu0 0.0
        %2075 = vmatprep.subr.mxu0 0.0
        %2076 = vmatpush1.msra.mxu0 0.0
        %2077 = vmatprep.subr.mxu0 0.0
        %2078 = vmatpush1.msra.mxu0 0.0
        %2079 = vmatprep.subr.mxu0 0.0
        %2080 = vmatpush1.msra.mxu0 0.0
        %2081 = vmatprep.subr.mxu0 0.0
        %2082 = vmatpush1.msra.mxu0 0.0
        %2083 = vmatprep.subr.mxu0 0.0
        %2084 = vmatpush1.msra.mxu0 0.0
        %2085 = vmatprep.subr.mxu0 0.0
        %2086 = vmatpush1.msra.mxu0 0.0
        %2087 = vmatprep.subr.mxu0 0.0
        %2088 = vmatpush1.msra.mxu0 0.0
        %2089 = vmatprep.subr.mxu0 0.0
        %2090 = vmatpush1.msra.mxu0 0.0
        %2091 = vmatprep.subr.mxu0 0.0
        %2092 = vmatpush1.msra.mxu0 0.0
        %2093 = vmatprep.subr.mxu0 0.0
        %2094 = vmatpush1.msra.mxu0 0.0
        %2095 = vmatprep.subr.mxu0 0.0
        %2096 = vmatpush1.msra.mxu0 0.0
        %2097 = vmatprep.subr.mxu0 0.0
        %2098 = vmatpush1.msra.mxu0 0.0
        %2099 = vmatprep.subr.mxu0 0.0
        %2100 = vmatpush1.msra.mxu0 0.0
        %2101 = vmatprep.subr.mxu0 0.0
        %2102 = vmatpush1.msra.mxu0 0.0
        %2103 = vmatprep.subr.mxu0 0.0
        %2104 = vmatpush1.msra.mxu0 0.0
        %2105 = vmatprep.mubr.f32.mxu0 0.0
        %2106 = vmatmul.mubr.f32.gmra.mrb[0].mxu0 %v1947
        %v2107 = vpop.f32.mrb[0].mxu0
        %v2108 = vadd.f32 0.0, %v2107
        %v2109 = vpop.f32.mrb[0].mxu0
        %2110 = vmatprep.mubr.f32.mxu0 0.0
        %2111 = vmatmul.mubr.f32.gmra.mrb[0].mxu0 %v1950
        %v2112 = vpop.f32.mrb[0].mxu0
        %v2113 = vadd.f32 0.0, %v2112
        %v2114 = vpop.f32.mrb[0].mxu0
        %2115 = vdwg.mxu0
        %v2116 = vld [vmem:[%s2030] sm:$0xff]
        %v2117 = vld [vmem:[%s2030 + $0x8] sm:$0xff]
        %v2118 = vadd.f32 %v2116, %v2108
        %v2119 = vadd.f32 %v2117, %v2113
        %2120 = vst.msk [vmem:[%s2030] sm:$0xff] %vm401, %v2118
        %2121 = vst.msk [vmem:[%s2030 + $0x8] sm:$0xff] %vm401, %v2119
        %v2122 = vld [vmem:[%s1518] sm:$0xf]
        %v2124 = vsel %vm435, %v2122, 0
        %2126 = vmatprep.subr.mxu0 0.0
        %2127 = vmatpush1.msra.mxu0 %v2124
        %2128 = vmatprep.subr.mxu0 0.0
        %2129 = vmatpush1.msra.mxu0 0.0
        %2130 = vmatprep.subr.mxu0 0.0
        %2131 = vmatpush1.msra.mxu0 0.0
        %2132 = vmatprep.subr.mxu0 0.0
        %2133 = vmatpush1.msra.mxu0 0.0
        %2134 = vmatprep.subr.mxu0 0.0
        %2135 = vmatpush1.msra.mxu0 0.0
        %2136 = vmatprep.subr.mxu0 0.0
        %2137 = vmatpush1.msra.mxu0 0.0
        %2138 = vmatprep.subr.mxu0 0.0
        %2139 = vmatpush1.msra.mxu0 0.0
        %2140 = vmatprep.subr.mxu0 0.0
        %2141 = vmatpush1.msra.mxu0 0.0
        %2142 = vmatprep.subr.mxu0 0.0
        %2143 = vmatpush1.msra.mxu0 0.0
        %2144 = vmatprep.subr.mxu0 0.0
        %2145 = vmatpush1.msra.mxu0 0.0
        %2146 = vmatprep.subr.mxu0 0.0
        %2147 = vmatpush1.msra.mxu0 0.0
        %2148 = vmatprep.subr.mxu0 0.0
        %2149 = vmatpush1.msra.mxu0 0.0
        %2150 = vmatprep.subr.mxu0 0.0
        %2151 = vmatpush1.msra.mxu0 0.0
        %2152 = vmatprep.subr.mxu0 0.0
        %2153 = vmatpush1.msra.mxu0 0.0
        %2154 = vmatprep.subr.mxu0 0.0
        %2155 = vmatpush1.msra.mxu0 0.0
        %2156 = vmatprep.subr.mxu0 0.0
        %2157 = vmatpush1.msra.mxu0 0.0
        %2158 = vmatprep.subr.mxu0 0.0
        %2159 = vmatpush1.msra.mxu0 0.0
        %2160 = vmatprep.subr.mxu0 0.0
        %2161 = vmatpush1.msra.mxu0 0.0
        %2162 = vmatprep.subr.mxu0 0.0
        %2163 = vmatpush1.msra.mxu0 0.0
        %2164 = vmatprep.subr.mxu0 0.0
        %2165 = vmatpush1.msra.mxu0 0.0
        %2166 = vmatprep.subr.mxu0 0.0
        %2167 = vmatpush1.msra.mxu0 0.0
        %2168 = vmatprep.subr.mxu0 0.0
        %2169 = vmatpush1.msra.mxu0 0.0
        %2170 = vmatprep.subr.mxu0 0.0
        %2171 = vmatpush1.msra.mxu0 0.0
        %2172 = vmatprep.subr.mxu0 0.0
        %2173 = vmatpush1.msra.mxu0 0.0
        %2174 = vmatprep.subr.mxu0 0.0
        %2175 = vmatpush1.msra.mxu0 0.0
        %2176 = vmatprep.subr.mxu0 0.0
        %2177 = vmatpush1.msra.mxu0 0.0
        %2178 = vmatprep.subr.mxu0 0.0
        %2179 = vmatpush1.msra.mxu0 0.0
        %2180 = vmatprep.subr.mxu0 0.0
        %2181 = vmatpush1.msra.mxu0 0.0
        %2182 = vmatprep.subr.mxu0 0.0
        %2183 = vmatpush1.msra.mxu0 0.0
        %2184 = vmatprep.subr.mxu0 0.0
        %2185 = vmatpush1.msra.mxu0 0.0
        %2186 = vmatprep.subr.mxu0 0.0
        %2187 = vmatpush1.msra.mxu0 0.0
        %2188 = vmatprep.subr.mxu0 0.0
        %2189 = vmatpush1.msra.mxu0 0.0
        %2190 = vmatprep.mubr.f32.mxu0 0.0
        %2191 = vmatmul.mubr.f32.gmra.mrb[0].mxu0 %v1947
        %v2192 = vpop.f32.mrb[0].mxu0
        %v2193 = vadd.f32 0.0, %v2192
        %v2194 = vpop.f32.mrb[0].mxu0
        %2195 = vmatprep.mubr.f32.mxu0 0.0
        %2196 = vmatmul.mubr.f32.gmra.mrb[0].mxu0 %v1950
        %v2197 = vpop.f32.mrb[0].mxu0
        %v2198 = vadd.f32 0.0, %v2197
        %v2199 = vpop.f32.mrb[0].mxu0
        %2200 = vdwg.mxu0
        %v2201 = vld [vmem:[%s2030] sm:$0xff]
        %v2202 = vld [vmem:[%s2030 + $0x8] sm:$0x7f]
        %v2205 = vrot.slane %v2193, 1
        %v2206 = vrot.slane %v2198, 1
        %v2207 = vsel %vm808, %v2205, %v2206
        %v2210 = vadd.f32 %v2201, %v2207
        %v2211 = vadd.f32 %v2202, %v2206
        %2212 = vst.msk [vmem:[%s2030] sm:$0xff] %vm401, %v2210
        %2213 = vst.msk [vmem:[%s2030 + $0x8] sm:$0x7f] %vm556, %v2211
      $region48: #{tpu_custom_call.1} parent=39 // pred_fallthru
        _
      %v2214 = vld [vmem:[#allocation2] sm:$0xff]
      %v2215 = vld [vmem:[#allocation2 + $0x8] sm:$0xff]
      %v2216 = vld [vmem:[#allocation2 + $0x10] sm:$0xff]
      %v2217 = vld [vmem:[#allocation2 + $0x18] sm:$0xff]
      %v2218 = vld [vmem:[#allocation2 + $0x20] sm:$0xff]
      %v2219 = vld [vmem:[#allocation2 + $0x28] sm:$0xff]
      %v2220 = vld [vmem:[#allocation2 + $0x30] sm:$0xff]
      %v2221 = vld [vmem:[#allocation2 + $0x38] sm:$0xff]
      %v2222 = vld [vmem:[%s4] sm:$0x1]
      %v2224 = vlaneseq
      %v2225 = vshrl.u32 %v2224, 7
      %v2226 = vsub.s32 0, %v2225
      %v2227 = vrot.slane %v2222, %v2226
      %v2229 = vadd.f32 %v2214, %v2227
      %v2230 = vadd.f32 %v2215, %v2227
      %v2231 = vadd.f32 %v2216, %v2227
      %v2232 = vadd.f32 %v2217, %v2227
      %v2233 = vadd.f32 %v2218, %v2227
      %v2234 = vadd.f32 %v2219, %v2227
      %v2235 = vadd.f32 %v2220, %v2227
      %v2236 = vadd.f32 %v2221, %v2227
      %v2237 = vmax.f32 %v2229, 0.0
      %v2238 = vmax.f32 %v2230, 0.0
      %v2239 = vmax.f32 %v2231, 0.0
      %v2240 = vmax.f32 %v2232, 0.0
      %v2241 = vmax.f32 %v2233, 0.0
      %v2242 = vmax.f32 %v2234, 0.0
      %v2243 = vmax.f32 %v2235, 0.0
      %v2244 = vmax.f32 %v2236, 0.0
      %v2245 = vld [vmem:[%s346] sm:$0xff]
      %v2246 = vld [vmem:[%s346 + $0x8] sm:$0xff]
      %v2247 = vld [vmem:[%s346 + $0x10] sm:$0xff]
      %v2248 = vld [vmem:[%s346 + $0x18] sm:$0xff]
      %v2249 = vld [vmem:[%s346 + $0x20] sm:$0xff]
      %v2250 = vld [vmem:[%s346 + $0x28] sm:$0xff]
      %v2251 = vld [vmem:[%s346 + $0x30] sm:$0xff]
      %v2252 = vld [vmem:[%s346 + $0x38] sm:$0xff]
      %v2253 = vadd.f32 %v2245, %v2237
      %v2254 = vadd.f32 %v2246, %v2238
      %v2255 = vadd.f32 %v2247, %v2239
      %v2256 = vadd.f32 %v2248, %v2240
      %v2257 = vadd.f32 %v2249, %v2241
      %v2258 = vadd.f32 %v2250, %v2242
      %v2259 = vadd.f32 %v2251, %v2243
      %v2260 = vadd.f32 %v2252, %v2244
      %2261 = vst.msk [vmem:[%s391] sm:$0xff] %vm401, %v2253
      %2262 = vst.msk [vmem:[%s391 + $0x8] sm:$0xff] %vm401, %v2254
      %2263 = vst.msk [vmem:[%s391 + $0x10] sm:$0xff] %vm401, %v2255
      %2264 = vst.msk [vmem:[%s391 + $0x18] sm:$0xff] %vm401, %v2256
      %2265 = vst.msk [vmem:[%s391 + $0x20] sm:$0xff] %vm401, %v2257
      %2266 = vst.msk [vmem:[%s391 + $0x28] sm:$0xff] %vm401, %v2258
      %2267 = vst.msk [vmem:[%s391 + $0x30] sm:$0xff] %vm401, %v2259
      %2268 = vst.msk [vmem:[%s391 + $0x38] sm:$0xff] %vm401, %v2260
      %s2269 = smul.u32 4, %s21
      %p2270 = scmp.lt.s32.totalorder %s20, 1
      %s2271 = scalar_select %p2270, %s20, 1
      %p2272 = scmp.lt.s32.totalorder %s2269, 15
      %s2273 = scalar_select %p2272, %s2269, 15
      %s2274 = smul.addr %s2273, 2
      %s2275 = smul.addr %s2271, 32
      %s2276 = sadd.s32 %s2274, %s2275
      %s2277 = smul.addr %s2276, 8
      %s2278 = scalar_lea.vmem %s5, %s2277
      // Predicated region
      $region49: #{tpu_custom_call.1} parent=39 // pred_check
        %p2279 = pneg %p190
      $region50: #{tpu_custom_call.1} parent=39 // pred_check_branch
        %2281 = sbr.rel (%p2279) target = $region52
      $region51: #{tpu_custom_call.1} parent=39 // pred_region
        %s2282 = smul.u32 4, %s21
      $region52: #{tpu_custom_call.1} parent=39 // pred_fallthru
        _
    $region40: #{tpu_custom_call.1} parent=5 // pred_fallthru
      _
    %p2283 = scmp.le.s32.totalorder 2, %s11
    // Predicated region
    $region53: #{tpu_custom_call.1} parent=5 // pred_check
      %p2284 = pneg %p2283
    $region54: #{tpu_custom_call.1} parent=5 // pred_check_branch
      %2286 = sbr.rel (%p2284) target = $region56
    $region55: #{tpu_custom_call.1} parent=5 // pred_region
      %s2287 = ssub.s32 %s11, 2
      // Predicated region
      $region57: #{tpu_custom_call.1} parent=55 // pred_check
        %p2288 = pneg %p196
      $region58: #{tpu_custom_call.1} parent=55 // pred_check_branch
        %2290 = sbr.rel (%p2288) target = $region60
      $region59: #{tpu_custom_call.1} parent=55 // pred_region
        %s2291 = smul.u32 4, %s23
        %p2292 = scmp.lt.s32.totalorder %s22, 1
        %s2293 = scalar_select %p2292, %s22, 1
        %p2294 = scmp.lt.s32.totalorder %s2291, 15
        %s2295 = scalar_select %p2294, %s2291, 15
        %s2296 = smul.addr %s2295, 2
        %s2297 = smul.addr %s2293, 32
        %s2298 = sadd.s32 %s2296, %s2297
        %s2299 = smul.addr %s2298, 8
        %s2300 = scalar_lea.vmem %s5, %s2299
      $region60: #{tpu_custom_call.1} parent=55 // pred_fallthru
        _
    $region56: #{tpu_custom_call.1} parent=5 // pred_fallthru
      _
  $region6: #{tpu_custom_call.1} parent=0 // loop_footer
    %s15 = sadd.s32 1, %s11
  $region7: #{tpu_custom_call.1} parent=0 // loop_footer_branch
    %10 = sbr.rel target = $region3
  $region8: #{tpu_custom_call.1} parent=0 // loop_exit
    _

</llo_original>
